<compile_context>
chip_gen: v7x
topology: tpu7x:2x2x1
jax: 0.10.0
libtpu: 0.0.40
codegen_flags: <defaults>
</compile_context>

<pallas_src>
import functools

import jax
import jax.numpy as jnp
from jax.experimental import pallas as pl
from jax.experimental.pallas import tpu as pltpu

# ----------------------------- configuration --------------------------------
BATCH = 2
SEQ = 16            # number of tokens
EMBED = 32          # embed_depth
HEADS = 4           # num_heads
DIM_HEAD = 8        # dim_head
INNER = HEADS * DIM_HEAD
SCALE = DIM_HEAD ** -0.5
EPS = 1e-5          # nn.LayerNorm default
# dropout = 0.0 -> identity (eval semantics), no RNG needed.


def _layernorm(x, g, b):
    mean = jnp.mean(x, axis=-1, keepdims=True)
    var = jnp.mean(jnp.square(x - mean), axis=-1, keepdims=True)
    return (x - mean) * jax.lax.rsqrt(var + EPS) * g + b


# ------------------------------- the kernel ---------------------------------
def attention_kernel(x_ref, vec_ref, wqkv_ref, wo_ref, out_ref,
                     *, batch, seq, heads, dim_head):
    B, S, H, dh = batch, seq, heads, dim_head
    inner = H * dh
    G = B * H                                    # fused (batch, head) axis

    ln_g = vec_ref[0:1, :]                       # (1, D)
    ln_b = vec_ref[1:2, :]
    b_o = vec_ref[2:3, :]

    # ---- LayerNorm over the embedding axis, batch folded into rows (f32) --
    xn = _layernorm(x_ref[...], ln_g, ln_b)      # (B*S, D) f32

    # ---- ONE lane-dense q/k/v projection: (B*S, D) @ (D, 3*inner) ----------
    # (softmax scale already folded into the q columns of wqkv)
    qkv = jnp.dot(xn.astype(jnp.bfloat16), wqkv_ref[...],
                  preferred_element_type=jnp.float32)        # (B*S, 3*inner)

    def to_heads(t):                             # (B*S, H*dh) -> (G, S, dh)
        return (t.reshape(B, S, H, dh)
                 .transpose(0, 2, 1, 3)
                 .reshape(G, S, dh))

    qh = to_heads(qkv[:, 0:inner]).astype(jnp.bfloat16)
    kh = to_heads(qkv[:, inner:2 * inner]).astype(jnp.bfloat16)
    vh = to_heads(qkv[:, 2 * inner:3 * inner]).astype(jnp.bfloat16)

    bmm = functools.partial(jax.lax.dot_general,
                            preferred_element_type=jnp.float32)

    # ---- attention scores + softmax (single (B*H)-batched chain) -----------
    dots = bmm(qh, kh, (((2,), (2,)), ((0,), (0,))))         # (G, S, S) f32
    dots = dots - jnp.max(dots, axis=-1, keepdims=True)
    ex = jnp.exp(dots)
    attn = ex * pl.reciprocal(jnp.sum(ex, axis=-1, keepdims=True), approx=True)

    # ---- weighted values ----------------------------------------------------
    o = bmm(attn.astype(jnp.bfloat16), vh,
            (((2,), (1,)), ((0,), (0,))))                    # (G, S, dh) f32

    # ---- merge heads + ONE lane-dense output projection ---------------------
    om = (o.reshape(B, H, S, dh)
           .transpose(0, 2, 1, 3)
           .reshape(B * S, inner)).astype(jnp.bfloat16)      # (B*S, inner)
    y = jnp.dot(om, wo_ref[...], preferred_element_type=jnp.float32)
    out_ref[...] = (y + b_o).astype(out_ref.dtype)           # (B*S, D)


# ------------------------------- wrapper -------------------------------------
@jax.jit
def attention_forward(x, params):
    B, S, D = x.shape
    inner = INNER

    # Lane-dense weight layouts (bf16), softmax scale folded into q columns.
    col_scale = jnp.concatenate(
        [jnp.full((inner,), SCALE, jnp.float32),
         jnp.ones((2 * inner,), jnp.float32)], axis=0)
    wqkv_bf = (params["wqkv"] * col_scale[None, :]).astype(jnp.bfloat16)  # (D, 3*inner)
    wo_bf = params["wo"].astype(jnp.bfloat16)                             # (inner, D)
    vecs = jnp.concatenate(
        [params["ln_g"], params["ln_b"], params["bo"]], axis=0)           # (3, D)

    x2 = x.reshape(B * S, D)

    kernel = functools.partial(attention_kernel, batch=B, seq=S,
                               heads=HEADS, dim_head=DIM_HEAD)
    out = pl.pallas_call(
        kernel,
        out_shape=jax.ShapeDtypeStruct((B * S, D), jnp.float32),
        in_specs=[pl.BlockSpec(memory_space=pltpu.MemorySpace.VMEM)] * 4,
        out_specs=pl.BlockSpec(memory_space=pltpu.MemorySpace.VMEM),
        compiler_params=pltpu.CompilerParams(vmem_limit_bytes=8 * 1024 * 1024),
    )(x2, vecs, wqkv_bf, wo_bf)
    return out.reshape(B, S, D)


# --------------------------- pure-JAX reference ------------------------------
def attention_reference(x, params):
    B, S, D = x.shape
    xn = _layernorm(x, params["ln_g"], params["ln_b"])
    qkv = xn @ params["wqkv"]
    q, k, v = jnp.split(qkv, 3, axis=-1)

    def heads(t):
        return t.reshape(B, S, HEADS, DIM_HEAD).transpose(0, 2, 1, 3)

    q, k, v = heads(q), heads(k), heads(v)
    dots = jnp.einsum("bhqd,bhkd->bhqk", q, k) * SCALE
    attn = jax.nn.softmax(dots, axis=-1)
    o = jnp.einsum("bhqk,bhkd->bhqd", attn, v)
    o = o.transpose(0, 2, 1, 3).reshape(B, S, INNER)
    return o @ params["wo"] + params["bo"]


# ------------------------------ param init -----------------------------------
def init_params(key):
    ks = jax.random.split(key, 5)
    s_qkv = 1.0 / jnp.sqrt(jnp.float32(EMBED))
    s_out = 1.0 / jnp.sqrt(jnp.float32(INNER))
    return {
        "ln_g": 1.0 + 0.1 * jax.random.normal(ks[0], (1, EMBED), jnp.float32),
        "ln_b": 0.1 * jax.random.normal(ks[1], (1, EMBED), jnp.float32),
        "wqkv": s_qkv * jax.random.normal(ks[2], (EMBED, 3 * INNER), jnp.float32),
        "wo": s_out * jax.random.normal(ks[3], (INNER, EMBED), jnp.float32),
        "bo": 0.1 * jax.random.normal(ks[4], (1, EMBED), jnp.float32),
    }


if __name__ == "__main__":
    key = jax.random.PRNGKey(0)
    k_x, k_p = jax.random.split(key)
    x = jax.random.normal(k_x, (BATCH, SEQ, EMBED), dtype=jnp.float32)
    params = init_params(k_p)

    out = jax.block_until_ready(attention_forward(x, params))
    ref = attention_reference(x, params)

    assert out.shape == (BATCH, SEQ, EMBED), out.shape
    max_err = jnp.max(jnp.abs(out - ref))
    # bf16 matmul operands + approx reciprocal -> small, bounded mismatch.
    assert jnp.allclose(out, ref, rtol=2e-2, atol=2e-2), float(max_err)

    print("KERNEL_OK")
</pallas_src>

<mosaic_0001>
module attributes {stable_mosaic.version = 11 : i64} {
  func.func @attention_kernel(%arg0: memref<32x32xf32, #tpu.memory_space<vmem>>, %arg1: memref<3x32xf32, #tpu.memory_space<vmem>>, %arg2: memref<32x96xbf16, #tpu.memory_space<vmem>>, %arg3: memref<32x32xbf16, #tpu.memory_space<vmem>>, %arg4: memref<32x32xf32, #tpu.memory_space<vmem>>) attributes {dimension_semantics = [], scalar_prefetch = 0 : i64, scratch_operands = 0 : i64, tpu.core_type = #tpu.core_type<tc>} {
    %c0 = arith.constant 0 : index
    %c0_0 = arith.constant 0 : index
    %0 = vector.load %arg1[%c0, %c0_0] : memref<3x32xf32, #tpu.memory_space<vmem>>, vector<1x32xf32>
    %c1 = arith.constant 1 : index
    %c0_1 = arith.constant 0 : index
    %1 = vector.load %arg1[%c1, %c0_1] : memref<3x32xf32, #tpu.memory_space<vmem>>, vector<1x32xf32>
    %c2 = arith.constant 2 : index
    %c0_2 = arith.constant 0 : index
    %2 = vector.load %arg1[%c2, %c0_2] : memref<3x32xf32, #tpu.memory_space<vmem>>, vector<1x32xf32>
    %c0_3 = arith.constant 0 : index
    %c0_4 = arith.constant 0 : index
    %3 = vector.load %arg0[%c0_3, %c0_4] : memref<32x32xf32, #tpu.memory_space<vmem>>, vector<32x32xf32>
    %cst = arith.constant dense<0.000000e+00> : vector<32xf32>
    %4 = vector.multi_reduction <add>, %3, %cst [1] : vector<32x32xf32> to vector<32xf32>
    %5 = vector.shape_cast %4 : vector<32xf32> to vector<32x1xf32>
    %cst_5 = arith.constant 3.200000e+01 : f32
    %6 = vector.broadcast %cst_5 : f32 to vector<32x1xf32>
    %7 = arith.divf %5, %6 : vector<32x1xf32>
    %8 = vector.broadcast %7 : vector<32x1xf32> to vector<32x32xf32>
    %9 = arith.subf %3, %8 : vector<32x32xf32>
    %10 = arith.mulf %9, %9 : vector<32x32xf32>
    %cst_6 = arith.constant dense<0.000000e+00> : vector<32xf32>
    %11 = vector.multi_reduction <add>, %10, %cst_6 [1] : vector<32x32xf32> to vector<32xf32>
    %12 = vector.shape_cast %11 : vector<32xf32> to vector<32x1xf32>
    %cst_7 = arith.constant 3.200000e+01 : f32
    %13 = vector.broadcast %cst_7 : f32 to vector<32x1xf32>
    %14 = arith.divf %12, %13 : vector<32x1xf32>
    %15 = vector.broadcast %7 : vector<32x1xf32> to vector<32x32xf32>
    %16 = arith.subf %3, %15 : vector<32x32xf32>
    %cst_8 = arith.constant 9.99999974E-6 : f32
    %17 = vector.broadcast %cst_8 : f32 to vector<32x1xf32>
    %18 = arith.addf %14, %17 : vector<32x1xf32>
    %19 = math.rsqrt %18 : vector<32x1xf32>
    %20 = vector.broadcast %19 : vector<32x1xf32> to vector<32x32xf32>
    %21 = arith.mulf %16, %20 : vector<32x32xf32>
    %22 = vector.broadcast %0 : vector<1x32xf32> to vector<32x32xf32>
    %23 = arith.mulf %21, %22 : vector<32x32xf32>
    %24 = vector.broadcast %1 : vector<1x32xf32> to vector<32x32xf32>
    %25 = arith.addf %23, %24 : vector<32x32xf32>
    %26 = arith.truncf %25 : vector<32x32xf32> to vector<32x32xbf16>
    %c0_9 = arith.constant 0 : index
    %c0_10 = arith.constant 0 : index
    %27 = vector.load %arg2[%c0_9, %c0_10] : memref<32x96xbf16, #tpu.memory_space<vmem>>, vector<32x96xbf16>
    %cst_11 = arith.constant dense<0.000000e+00> : vector<32x96xf32>
    %28 = tpu.matmul %26, %27, %cst_11 {dimension_numbers = #tpu.dot_dimension_numbers<[1], [0], [0], [1], [0, 0, 1, 1], [], []>} : vector<32x32xbf16>, vector<32x96xbf16>, vector<32x96xf32> -> vector<32x96xf32>
    %29 = vector.extract_strided_slice %28 {offsets = [0, 0], sizes = [32, 32], strides = [1, 1]} : vector<32x96xf32> to vector<32x32xf32>
    %30 = vector.shape_cast %29 : vector<32x32xf32> to vector<2x16x4x8xf32>
    %31 = tpu.transpose %30, [0, 2, 1, 3] : vector<2x16x4x8xf32> -> vector<2x4x16x8xf32>
    %32 = vector.shape_cast %31 : vector<2x4x16x8xf32> to vector<8x16x8xf32>
    %33 = arith.truncf %32 : vector<8x16x8xf32> to vector<8x16x8xbf16>
    %34 = vector.extract_strided_slice %28 {offsets = [0, 32], sizes = [32, 32], strides = [1, 1]} : vector<32x96xf32> to vector<32x32xf32>
    %35 = vector.shape_cast %34 : vector<32x32xf32> to vector<2x16x4x8xf32>
    %36 = tpu.transpose %35, [0, 2, 1, 3] : vector<2x16x4x8xf32> -> vector<2x4x16x8xf32>
    %37 = vector.shape_cast %36 : vector<2x4x16x8xf32> to vector<8x16x8xf32>
    %38 = arith.truncf %37 : vector<8x16x8xf32> to vector<8x16x8xbf16>
    %39 = vector.extract_strided_slice %28 {offsets = [0, 64], sizes = [32, 32], strides = [1, 1]} : vector<32x96xf32> to vector<32x32xf32>
    %40 = vector.shape_cast %39 : vector<32x32xf32> to vector<2x16x4x8xf32>
    %41 = tpu.transpose %40, [0, 2, 1, 3] : vector<2x16x4x8xf32> -> vector<2x4x16x8xf32>
    %42 = vector.shape_cast %41 : vector<2x4x16x8xf32> to vector<8x16x8xf32>
    %43 = arith.truncf %42 : vector<8x16x8xf32> to vector<8x16x8xbf16>
    %cst_12 = arith.constant dense<0.000000e+00> : vector<8x16x16xf32>
    %44 = tpu.matmul %33, %38, %cst_12 {dimension_numbers = #tpu.dot_dimension_numbers<[2], [2], [1], [1], [0, 0, 0, 1, 1, 1], [0], [0]>} : vector<8x16x8xbf16>, vector<8x16x8xbf16>, vector<8x16x16xf32> -> vector<8x16x16xf32>
    %cst_13 = arith.constant dense<0xFF800000> : vector<8x16xf32>
    %45 = vector.multi_reduction <maximumf>, %44, %cst_13 [2] : vector<8x16x16xf32> to vector<8x16xf32>
    %46 = vector.shape_cast %45 : vector<8x16xf32> to vector<8x16x1xf32>
    %47 = vector.broadcast %46 : vector<8x16x1xf32> to vector<8x16x16xf32>
    %48 = arith.subf %44, %47 : vector<8x16x16xf32>
    %49 = math.exp %48 : vector<8x16x16xf32>
    %cst_14 = arith.constant dense<0.000000e+00> : vector<8x16xf32>
    %50 = vector.multi_reduction <add>, %49, %cst_14 [2] : vector<8x16x16xf32> to vector<8x16xf32>
    %51 = vector.shape_cast %50 : vector<8x16xf32> to vector<8x16x1xf32>
    %52 = tpu.reciprocal %51 {approx = true} : vector<8x16x1xf32> -> vector<8x16x1xf32>
    %53 = vector.broadcast %52 : vector<8x16x1xf32> to vector<8x16x16xf32>
    %54 = arith.mulf %49, %53 : vector<8x16x16xf32>
    %55 = arith.truncf %54 : vector<8x16x16xf32> to vector<8x16x16xbf16>
    %cst_15 = arith.constant dense<0.000000e+00> : vector<8x16x8xf32>
    %56 = tpu.matmul %55, %43, %cst_15 {dimension_numbers = #tpu.dot_dimension_numbers<[2], [1], [1], [2], [0, 0, 0, 1, 1, 2], [0], [0]>} : vector<8x16x16xbf16>, vector<8x16x8xbf16>, vector<8x16x8xf32> -> vector<8x16x8xf32>
    %57 = vector.shape_cast %56 : vector<8x16x8xf32> to vector<2x4x16x8xf32>
    %58 = tpu.transpose %57, [0, 2, 1, 3] : vector<2x4x16x8xf32> -> vector<2x16x4x8xf32>
    %59 = vector.shape_cast %58 : vector<2x16x4x8xf32> to vector<32x32xf32>
    %60 = arith.truncf %59 : vector<32x32xf32> to vector<32x32xbf16>
    %c0_16 = arith.constant 0 : index
    %c0_17 = arith.constant 0 : index
    %61 = vector.load %arg3[%c0_16, %c0_17] : memref<32x32xbf16, #tpu.memory_space<vmem>>, vector<32x32xbf16>
    %cst_18 = arith.constant dense<0.000000e+00> : vector<32x32xf32>
    %62 = tpu.matmul %60, %61, %cst_18 {dimension_numbers = #tpu.dot_dimension_numbers<[1], [0], [0], [1], [0, 0, 1, 1], [], []>} : vector<32x32xbf16>, vector<32x32xbf16>, vector<32x32xf32> -> vector<32x32xf32>
    %63 = vector.broadcast %2 : vector<1x32xf32> to vector<32x32xf32>
    %64 = arith.addf %62, %63 : vector<32x32xf32>
    %c0_19 = arith.constant 0 : index
    %c0_20 = arith.constant 0 : index
    %65 = vector.load %arg4[%c0_19, %c0_20] : memref<32x32xf32, #tpu.memory_space<vmem>>, vector<32x32xf32>
    tpu.vector_store %arg4[%c0_19, %c0_20], %64 {strides = array<i32>} : memref<32x32xf32, #tpu.memory_space<vmem>>, vector<32x32xf32>,
    return
  }
}

</mosaic_0001>

<llo_original>
// kernel: attention_forward.1
$region0: #{attention_forward.1}
  #allocation0 [shape = 'u32[]', space=smem, size = 0x4, offset = 0x4, fixed_abs, tag = 'smem constant byte address 0x4 - core index']
  #allocation1 [shape = 'u32[144,128]{1,0:T(1,128)}', space=vmem, size = 0x12000, scoped, tag = 'internal scratch']
  %s0 = inlined_call_operand.vmem [shape: f32[32,32], index: 0, kind: input, shape index: {}]
  %s1 = inlined_call_operand.vmem [shape: f32[3,32], index: 1, kind: input, shape index: {}]
  %s2 = inlined_call_operand.vmem [shape: bf16[32,96], index: 2, kind: input, shape index: {}]
  %s3 = inlined_call_operand.vmem [shape: bf16[32,32], index: 3, kind: input, shape index: {}]
  %s4 = inlined_call_operand.hbm [shape: f32[32,32], index: 4, kind: output, shape index: {}]
  %s5 = sld [smem:[#allocation0]]
  $region26: #{attention_forward.1} parent=0
    _
  %s7 = ssub.s32 1, %s5
  %s8 = scalar_select 0, %s7, %s5
  $region1: #{attention_forward.1} parent=0
    #allocation2 [shape = 'u8[16384]{0}', space=vmem, size = 0x4000, scoped, tag = 'output window, operand 0, single buffered']
    #allocation3 [shape = 's32[1]{0}', space=sflag, size = 0x4, scoped, tag = 'scoped memory for attention_forward.1']
    %9 = vsyncpa [#allocation3], 0
    // Predicated region
    $region2: #{attention_forward.1} parent=1 // pred_check
      _
    $region3: #{attention_forward.1} parent=1 // pred_check_branch
      %11 = sbr.rel (0) target = $region5
    $region4: #{attention_forward.1} parent=1 // pred_region
      _
    $region5: #{attention_forward.1} parent=1 // pred_fallthru
      _
    // Predicated region
    $region6: #{attention_forward.1} parent=1 // pred_check
      _
    $region7: #{attention_forward.1} parent=1 // pred_check_branch
      %13 = sbr.rel (0) target = $region9
    $region8: #{attention_forward.1} parent=1 // pred_region
      _
    $region9: #{attention_forward.1} parent=1 // pred_fallthru
      _
    // Predicated region
    $region10: #{attention_forward.1} parent=1 // pred_check
      _
    $region11: #{attention_forward.1} parent=1 // pred_check_branch
      %15 = sbr.rel (0) target = $region13
    $region12: #{attention_forward.1} parent=1 // pred_region
      _
    $region13: #{attention_forward.1} parent=1 // pred_fallthru
      _
    // Predicated region
    $region14: #{attention_forward.1} parent=1 // pred_check
      _
    $region15: #{attention_forward.1} parent=1 // pred_check_branch
      %17 = sbr.rel (0) target = $region17
    $region16: #{attention_forward.1} parent=1 // pred_region
      _
    $region17: #{attention_forward.1} parent=1 // pred_fallthru
      _
    %v19 = vld [vmem:[%s1] sm:$0x1]
    %v20 = vld [vmem:[%s1 + $0x1] sm:$0x1]
    %v21 = vld [vmem:[%s1 + $0x2] sm:$0x1]
    %v22 = vld [vmem:[%s0] sm:$0xff]
    %v23 = vld [vmem:[%s0 + $0x8] sm:$0xff]
    %v24 = vld [vmem:[%s0 + $0x10] sm:$0xff]
    %v25 = vld [vmem:[%s0 + $0x18] sm:$0xff]
    %vm26 = vcmask 261120
    %v27 = vsel %vm26, %v22, 0.0
    %28 = vadd.xlane.f32.xlu0 %v27
    %v29 = vpop.xlane.xlu0 %28
    %v30 = vsel %vm26, %v23, 0.0
    %31 = vadd.xlane.f32.xlu0 %v30
    %v32 = vpop.xlane.xlu0 %31
    %v33 = vsel %vm26, %v24, 0.0
    %34 = vadd.xlane.f32.xlu0 %v33
    %v35 = vpop.xlane.xlu0 %34
    %v36 = vsel %vm26, %v25, 0.0
    %37 = vadd.xlane.f32.xlu0 %v36
    %v38 = vpop.xlane.xlu0 %37
    %v39 = vrcp.pop 32.0
    %v40 = vmul.f32 %v29, %v39
    %v41 = vmul.f32 %v32, %v39
    %v42 = vmul.f32 %v35, %v39
    %v43 = vmul.f32 %v38, %v39
    %v44 = vsub.f32 %v22, %v40
    %v45 = vsub.f32 %v23, %v41
    %v46 = vsub.f32 %v24, %v42
    %v47 = vsub.f32 %v25, %v43
    %v48 = vmul.f32 %v44, %v44
    %v49 = vmul.f32 %v45, %v45
    %v50 = vmul.f32 %v46, %v46
    %v51 = vmul.f32 %v47, %v47
    %v52 = vsel %vm26, %v48, 0.0
    %53 = vadd.xlane.f32.xlu0 %v52
    %v54 = vpop.xlane.xlu0 %53
    %v55 = vsel %vm26, %v49, 0.0
    %56 = vadd.xlane.f32.xlu0 %v55
    %v57 = vpop.xlane.xlu0 %56
    %v58 = vsel %vm26, %v50, 0.0
    %59 = vadd.xlane.f32.xlu0 %v58
    %v60 = vpop.xlane.xlu0 %59
    %v61 = vsel %vm26, %v51, 0.0
    %62 = vadd.xlane.f32.xlu0 %v61
    %v63 = vpop.xlane.xlu0 %62
    %v64 = vmul.f32 %v54, %v39
    %v65 = vmul.f32 %v57, %v39
    %v66 = vmul.f32 %v60, %v39
    %v67 = vmul.f32 %v63, %v39
    %v68 = vadd.f32 %v64, 1e-05
    %v69 = vadd.f32 %v65, 1e-05
    %v70 = vadd.f32 %v66, 1e-05
    %v71 = vadd.f32 %v67, 1e-05
    %v72 = vrsqrt.pop %v68
    %v73 = vrsqrt.pop %v69
    %v74 = vrsqrt.pop %v70
    %v75 = vrsqrt.pop %v71
    %v76 = vmul.f32 %v44, %v72
    %v77 = vmul.f32 %v45, %v73
    %v78 = vmul.f32 %v46, %v74
    %v79 = vmul.f32 %v47, %v75
    %v80 = vlaneseq
    %v81 = vshrl.u32 %v80, 7
    %v82 = vsub.s32 0, %v81
    %v83 = vrot.slane %v19, %v82
    %v84 = vmul.f32 %v76, %v83
    %v85 = vmul.f32 %v77, %v83
    %v86 = vmul.f32 %v78, %v83
    %v87 = vmul.f32 %v79, %v83
    %v88 = vlaneseq
    %v89 = vshrl.u32 %v88, 7
    %v90 = vsub.s32 0, %v89
    %v91 = vrot.slane %v20, %v90
    %v92 = vadd.f32 %v84, %v91
    %v93 = vadd.f32 %v85, %v91
    %v94 = vadd.f32 %v86, %v91
    %v95 = vadd.f32 %v87, %v91
    %v96 = vpack.c.bf16 %v93, %v92
    %v97 = vpack.c.bf16 %v95, %v94
    %v98 = vld [vmem:[%s2] sm:$0xf]
    %v99 = vld [vmem:[%s2 + $0x4] sm:$0xf]
    %v100 = vld [vmem:[%s2 + $0x8] sm:$0xf]
    %v101 = vld [vmem:[%s2 + $0xc] sm:$0xf]
    %v106 = vunpack.c.l.b16 %v98
    %v107 = vunpack.c.l.b16 %v99
    %v108 = vunpack.c.l.b16 %v100
    %v109 = vunpack.c.l.b16 %v101
    %v110 = vpack.c.b16 %v107, %v106
    %v111 = vpack.c.b16 %v109, %v108
    %v115 = vsel %vm26, %v96, 0
    %v118 = vsel %vm26, %v97, 0
    %120 = vmatprep.subr.bf16.mxu0 0
    %121 = vmatpush1.bf16.msra.mxu0 %v110
    %122 = vmatprep.subr.bf16.mxu0 0
    %123 = vmatpush1.bf16.msra.mxu0 %v111
    %124 = vmatprep.subr.bf16.mxu0 0
    %125 = vmatpush1.bf16.msra.mxu0 0
    %126 = vmatprep.subr.bf16.mxu0 0
    %127 = vmatpush1.bf16.msra.mxu0 0
    %128 = vmatprep.subr.bf16.mxu0 0
    %129 = vmatpush1.bf16.msra.mxu0 0
    %130 = vmatprep.subr.bf16.mxu0 0
    %131 = vmatpush1.bf16.msra.mxu0 0
    %132 = vmatprep.subr.bf16.mxu0 0
    %133 = vmatpush1.bf16.msra.mxu0 0
    %134 = vmatprep.subr.bf16.mxu0 0
    %135 = vmatpush1.bf16.msra.mxu0 0
    %136 = vmatprep.subr.bf16.mxu0 0
    %137 = vmatpush1.bf16.msra.mxu0 0
    %138 = vmatprep.subr.bf16.mxu0 0
    %139 = vmatpush1.bf16.msra.mxu0 0
    %140 = vmatprep.subr.bf16.mxu0 0
    %141 = vmatpush1.bf16.msra.mxu0 0
    %142 = vmatprep.subr.bf16.mxu0 0
    %143 = vmatpush1.bf16.msra.mxu0 0
    %144 = vmatprep.subr.bf16.mxu0 0
    %145 = vmatpush1.bf16.msra.mxu0 0
    %146 = vmatprep.subr.bf16.mxu0 0
    %147 = vmatpush1.bf16.msra.mxu0 0
    %148 = vmatprep.subr.bf16.mxu0 0
    %149 = vmatpush1.bf16.msra.mxu0 0
    %150 = vmatprep.subr.bf16.mxu0 0
    %151 = vmatpush1.bf16.msra.mxu0 0
    %152 = vmatprep.mubr.bf16.mxu0 0
    %153 = vmatmul.mubr.bf16.gmra.mrb[0].mxu0 %v115
    %v154 = vpop.f32.mrb[0].mxu0
    %v155 = vadd.f32 0.0, %v154
    %v156 = vpop.f32.mrb[0].mxu0
    %v157 = vpop.f32.mrb[0].mxu0
    %v158 = vadd.f32 0.0, %v157
    %v159 = vpop.f32.mrb[0].mxu0
    %160 = vmatprep.mubr.bf16.mxu0 0
    %161 = vmatmul.mubr.bf16.gmra.mrb[0].mxu0 %v118
    %v162 = vpop.f32.mrb[0].mxu0
    %v163 = vadd.f32 0.0, %v162
    %v164 = vpop.f32.mrb[0].mxu0
    %v165 = vpop.f32.mrb[0].mxu0
    %v166 = vadd.f32 0.0, %v165
    %v167 = vpop.f32.mrb[0].mxu0
    %168 = vdwg.mxu0
    %173 = vrot.lane.b32.xlu0 %v155, 120
    %v174 = vpop.permute.xlu0 %173
    %175 = vrot.lane.b32.xlu0 %v158, 120
    %v176 = vpop.permute.xlu0 %175
    %177 = vrot.lane.b32.xlu0 %v163, 120
    %v178 = vpop.permute.xlu0 %177
    %179 = vrot.lane.b32.xlu0 %v166, 120
    %v180 = vpop.permute.xlu0 %179
    %185 = vrot.lane.b32.xlu0 %v155, 112
    %v186 = vpop.permute.xlu0 %185
    %187 = vrot.lane.b32.xlu0 %v158, 112
    %v188 = vpop.permute.xlu0 %187
    %189 = vrot.lane.b32.xlu0 %v163, 112
    %v190 = vpop.permute.xlu0 %189
    %191 = vrot.lane.b32.xlu0 %v166, 112
    %v192 = vpop.permute.xlu0 %191
    %197 = vrot.lane.b32.xlu0 %v155, 104
    %v198 = vpop.permute.xlu0 %197
    %199 = vrot.lane.b32.xlu0 %v158, 104
    %v200 = vpop.permute.xlu0 %199
    %201 = vrot.lane.b32.xlu0 %v163, 104
    %v202 = vpop.permute.xlu0 %201
    %203 = vrot.lane.b32.xlu0 %v166, 104
    %v204 = vpop.permute.xlu0 %203
    %v209 = vcombine.low %v155, %v186
    %v210 = vcombine.high %v155, %v186
    %v212 = vunpack.c.l.s4 1983009808
    %v213 = vunpack.c.0.s8 %v212
    %v214 = vlaneseq
    %v215 = vshrl.u32 %v214, 7
    %v216 = vsub.s32 %v213, %v215
    %v217 = vrot.slane %v209, %v216
    %v219 = vunpack.c.l.s4 1983009808
    %v220 = vunpack.c.0.s8 %v219
    %v221 = vlaneseq
    %v222 = vshrl.u32 %v221, 7
    %v223 = vsub.s32 %v220, %v222
    %v224 = vrot.slane %v210, %v223
    %v225 = vcombine.low %v174, %v198
    %v226 = vcombine.high %v174, %v198
    %v228 = vunpack.c.l.s4 1983009808
    %v229 = vunpack.c.0.s8 %v228
    %v230 = vlaneseq
    %v231 = vshrl.u32 %v230, 7
    %v232 = vsub.s32 %v229, %v231
    %v233 = vrot.slane %v225, %v232
    %v235 = vunpack.c.l.s4 1983009808
    %v236 = vunpack.c.0.s8 %v235
    %v237 = vlaneseq
    %v238 = vshrl.u32 %v237, 7
    %v239 = vsub.s32 %v236, %v238
    %v240 = vrot.slane %v226, %v239
    %v241 = vcombine.low %v217, %v233
    %v242 = vcombine.high %v217, %v233
    %v244 = vunpack.c.l.s4 1934713408
    %v245 = vunpack.c.0.s8 %v244
    %v246 = vlaneseq
    %v247 = vshrl.u32 %v246, 7
    %v248 = vsub.s32 %v245, %v247
    %v249 = vrot.slane %v241, %v248
    %v251 = vunpack.c.l.s4 1934713408
    %v252 = vunpack.c.0.s8 %v251
    %v253 = vlaneseq
    %v254 = vshrl.u32 %v253, 7
    %v255 = vsub.s32 %v252, %v254
    %v256 = vrot.slane %v242, %v255
    %v257 = vcombine.low %v224, %v240
    %v258 = vcombine.high %v224, %v240
    %v260 = vunpack.c.l.s4 1934713408
    %v261 = vunpack.c.0.s8 %v260
    %v262 = vlaneseq
    %v263 = vshrl.u32 %v262, 7
    %v264 = vsub.s32 %v261, %v263
    %v265 = vrot.slane %v257, %v264
    %v267 = vunpack.c.l.s4 1934713408
    %v268 = vunpack.c.0.s8 %v267
    %v269 = vlaneseq
    %v270 = vshrl.u32 %v269, 7
    %v271 = vsub.s32 %v268, %v270
    %v272 = vrot.slane %v258, %v271
    %v273 = vcombine.high %v249, 0.0
    %v274 = vcombine.high %v256, 0.0
    %v275 = vcombine.high %v265, 0.0
    %v276 = vcombine.high %v272, 0.0
    %v277 = vcombine.low %v158, %v188
    %v278 = vcombine.high %v158, %v188
    %v280 = vunpack.c.l.s4 1983009808
    %v281 = vunpack.c.0.s8 %v280
    %v282 = vlaneseq
    %v283 = vshrl.u32 %v282, 7
    %v284 = vsub.s32 %v281, %v283
    %v285 = vrot.slane %v277, %v284
    %v287 = vunpack.c.l.s4 1983009808
    %v288 = vunpack.c.0.s8 %v287
    %v289 = vlaneseq
    %v290 = vshrl.u32 %v289, 7
    %v291 = vsub.s32 %v288, %v290
    %v292 = vrot.slane %v278, %v291
    %v293 = vcombine.low %v176, %v200
    %v294 = vcombine.high %v176, %v200
    %v296 = vunpack.c.l.s4 1983009808
    %v297 = vunpack.c.0.s8 %v296
    %v298 = vlaneseq
    %v299 = vshrl.u32 %v298, 7
    %v300 = vsub.s32 %v297, %v299
    %v301 = vrot.slane %v293, %v300
    %v303 = vunpack.c.l.s4 1983009808
    %v304 = vunpack.c.0.s8 %v303
    %v305 = vlaneseq
    %v306 = vshrl.u32 %v305, 7
    %v307 = vsub.s32 %v304, %v306
    %v308 = vrot.slane %v294, %v307
    %v309 = vcombine.low %v285, %v301
    %v310 = vcombine.high %v285, %v301
    %v312 = vunpack.c.l.s4 1934713408
    %v313 = vunpack.c.0.s8 %v312
    %v314 = vlaneseq
    %v315 = vshrl.u32 %v314, 7
    %v316 = vsub.s32 %v313, %v315
    %v317 = vrot.slane %v309, %v316
    %v319 = vunpack.c.l.s4 1934713408
    %v320 = vunpack.c.0.s8 %v319
    %v321 = vlaneseq
    %v322 = vshrl.u32 %v321, 7
    %v323 = vsub.s32 %v320, %v322
    %v324 = vrot.slane %v310, %v323
    %v325 = vcombine.low %v292, %v308
    %v326 = vcombine.high %v292, %v308
    %v328 = vunpack.c.l.s4 1934713408
    %v329 = vunpack.c.0.s8 %v328
    %v330 = vlaneseq
    %v331 = vshrl.u32 %v330, 7
    %v332 = vsub.s32 %v329, %v331
    %v333 = vrot.slane %v325, %v332
    %v335 = vunpack.c.l.s4 1934713408
    %v336 = vunpack.c.0.s8 %v335
    %v337 = vlaneseq
    %v338 = vshrl.u32 %v337, 7
    %v339 = vsub.s32 %v336, %v338
    %v340 = vrot.slane %v326, %v339
    %v341 = vcombine.high %v317, 0.0
    %v342 = vcombine.high %v324, 0.0
    %v343 = vcombine.high %v333, 0.0
    %v344 = vcombine.high %v340, 0.0
    %v345 = vcombine.low %v163, %v190
    %v346 = vcombine.high %v163, %v190
    %v348 = vunpack.c.l.s4 1983009808
    %v349 = vunpack.c.0.s8 %v348
    %v350 = vlaneseq
    %v351 = vshrl.u32 %v350, 7
    %v352 = vsub.s32 %v349, %v351
    %v353 = vrot.slane %v345, %v352
    %v355 = vunpack.c.l.s4 1983009808
    %v356 = vunpack.c.0.s8 %v355
    %v357 = vlaneseq
    %v358 = vshrl.u32 %v357, 7
    %v359 = vsub.s32 %v356, %v358
    %v360 = vrot.slane %v346, %v359
    %v361 = vcombine.low %v178, %v202
    %v362 = vcombine.high %v178, %v202
    %v364 = vunpack.c.l.s4 1983009808
    %v365 = vunpack.c.0.s8 %v364
    %v366 = vlaneseq
    %v367 = vshrl.u32 %v366, 7
    %v368 = vsub.s32 %v365, %v367
    %v369 = vrot.slane %v361, %v368
    %v371 = vunpack.c.l.s4 1983009808
    %v372 = vunpack.c.0.s8 %v371
    %v373 = vlaneseq
    %v374 = vshrl.u32 %v373, 7
    %v375 = vsub.s32 %v372, %v374
    %v376 = vrot.slane %v362, %v375
    %v377 = vcombine.low %v353, %v369
    %v378 = vcombine.high %v353, %v369
    %v380 = vunpack.c.l.s4 1934713408
    %v381 = vunpack.c.0.s8 %v380
    %v382 = vlaneseq
    %v383 = vshrl.u32 %v382, 7
    %v384 = vsub.s32 %v381, %v383
    %v385 = vrot.slane %v377, %v384
    %v387 = vunpack.c.l.s4 1934713408
    %v388 = vunpack.c.0.s8 %v387
    %v389 = vlaneseq
    %v390 = vshrl.u32 %v389, 7
    %v391 = vsub.s32 %v388, %v390
    %v392 = vrot.slane %v378, %v391
    %v393 = vcombine.low %v360, %v376
    %v394 = vcombine.high %v360, %v376
    %v396 = vunpack.c.l.s4 1934713408
    %v397 = vunpack.c.0.s8 %v396
    %v398 = vlaneseq
    %v399 = vshrl.u32 %v398, 7
    %v400 = vsub.s32 %v397, %v399
    %v401 = vrot.slane %v393, %v400
    %v403 = vunpack.c.l.s4 1934713408
    %v404 = vunpack.c.0.s8 %v403
    %v405 = vlaneseq
    %v406 = vshrl.u32 %v405, 7
    %v407 = vsub.s32 %v404, %v406
    %v408 = vrot.slane %v394, %v407
    %v409 = vcombine.high %v385, 0.0
    %v410 = vcombine.high %v392, 0.0
    %v411 = vcombine.high %v401, 0.0
    %v412 = vcombine.high %v408, 0.0
    %v413 = vcombine.low %v166, %v192
    %v414 = vcombine.high %v166, %v192
    %v416 = vunpack.c.l.s4 1983009808
    %v417 = vunpack.c.0.s8 %v416
    %v418 = vlaneseq
    %v419 = vshrl.u32 %v418, 7
    %v420 = vsub.s32 %v417, %v419
    %v421 = vrot.slane %v413, %v420
    %v423 = vunpack.c.l.s4 1983009808
    %v424 = vunpack.c.0.s8 %v423
    %v425 = vlaneseq
    %v426 = vshrl.u32 %v425, 7
    %v427 = vsub.s32 %v424, %v426
    %v428 = vrot.slane %v414, %v427
    %v429 = vcombine.low %v180, %v204
    %v430 = vcombine.high %v180, %v204
    %v432 = vunpack.c.l.s4 1983009808
    %v433 = vunpack.c.0.s8 %v432
    %v434 = vlaneseq
    %v435 = vshrl.u32 %v434, 7
    %v436 = vsub.s32 %v433, %v435
    %v437 = vrot.slane %v429, %v436
    %v439 = vunpack.c.l.s4 1983009808
    %v440 = vunpack.c.0.s8 %v439
    %v441 = vlaneseq
    %v442 = vshrl.u32 %v441, 7
    %v443 = vsub.s32 %v440, %v442
    %v444 = vrot.slane %v430, %v443
    %v445 = vcombine.low %v421, %v437
    %v446 = vcombine.high %v421, %v437
    %v448 = vunpack.c.l.s4 1934713408
    %v449 = vunpack.c.0.s8 %v448
    %v450 = vlaneseq
    %v451 = vshrl.u32 %v450, 7
    %v452 = vsub.s32 %v449, %v451
    %v453 = vrot.slane %v445, %v452
    %v455 = vunpack.c.l.s4 1934713408
    %v456 = vunpack.c.0.s8 %v455
    %v457 = vlaneseq
    %v458 = vshrl.u32 %v457, 7
    %v459 = vsub.s32 %v456, %v458
    %v460 = vrot.slane %v446, %v459
    %v461 = vcombine.low %v428, %v444
    %v462 = vcombine.high %v428, %v444
    %v464 = vunpack.c.l.s4 1934713408
    %v465 = vunpack.c.0.s8 %v464
    %v466 = vlaneseq
    %v467 = vshrl.u32 %v466, 7
    %v468 = vsub.s32 %v465, %v467
    %v469 = vrot.slane %v461, %v468
    %v471 = vunpack.c.l.s4 1934713408
    %v472 = vunpack.c.0.s8 %v471
    %v473 = vlaneseq
    %v474 = vshrl.u32 %v473, 7
    %v475 = vsub.s32 %v472, %v474
    %v476 = vrot.slane %v462, %v475
    %v477 = vcombine.high %v453, 0.0
    %v478 = vcombine.high %v460, 0.0
    %v479 = vcombine.high %v469, 0.0
    %v480 = vcombine.high %v476, 0.0
    %v481 = vcombine.low %v249, %v256
    %v483 = vunpack.c.l.s4 1983009808
    %v484 = vunpack.c.0.s8 %v483
    %v485 = vlaneseq
    %v486 = vshrl.u32 %v485, 7
    %v487 = vsub.s32 %v484, %v486
    %v488 = vrot.slane %v481, %v487
    %v489 = vcombine.low %v273, %v274
    %v491 = vunpack.c.l.s4 1983009808
    %v492 = vunpack.c.0.s8 %v491
    %v493 = vlaneseq
    %v494 = vshrl.u32 %v493, 7
    %v495 = vsub.s32 %v492, %v494
    %v496 = vrot.slane %v489, %v495
    %v497 = vcombine.low %v265, %v272
    %v499 = vunpack.c.l.s4 1983009808
    %v500 = vunpack.c.0.s8 %v499
    %v501 = vlaneseq
    %v502 = vshrl.u32 %v501, 7
    %v503 = vsub.s32 %v500, %v502
    %v504 = vrot.slane %v497, %v503
    %v505 = vcombine.low %v275, %v276
    %v507 = vunpack.c.l.s4 1983009808
    %v508 = vunpack.c.0.s8 %v507
    %v509 = vlaneseq
    %v510 = vshrl.u32 %v509, 7
    %v511 = vsub.s32 %v508, %v510
    %v512 = vrot.slane %v505, %v511
    %v513 = vcombine.low %v488, %v496
    %v514 = vcombine.high %v488, %v496
    %v516 = vunpack.c.l.s4 1934713408
    %v517 = vunpack.c.0.s8 %v516
    %v518 = vlaneseq
    %v519 = vshrl.u32 %v518, 7
    %v520 = vsub.s32 %v517, %v519
    %v521 = vrot.slane %v513, %v520
    %v523 = vunpack.c.l.s4 1934713408
    %v524 = vunpack.c.0.s8 %v523
    %v525 = vlaneseq
    %v526 = vshrl.u32 %v525, 7
    %v527 = vsub.s32 %v524, %v526
    %v528 = vrot.slane %v514, %v527
    %v529 = vcombine.low %v504, %v512
    %v530 = vcombine.high %v504, %v512
    %v532 = vunpack.c.l.s4 1934713408
    %v533 = vunpack.c.0.s8 %v532
    %v534 = vlaneseq
    %v535 = vshrl.u32 %v534, 7
    %v536 = vsub.s32 %v533, %v535
    %v537 = vrot.slane %v529, %v536
    %v539 = vunpack.c.l.s4 1934713408
    %v540 = vunpack.c.0.s8 %v539
    %v541 = vlaneseq
    %v542 = vshrl.u32 %v541, 7
    %v543 = vsub.s32 %v540, %v542
    %v544 = vrot.slane %v530, %v543
    %v545 = vcombine.low %v521, %v537
    %v546 = vcombine.high %v521, %v537
    %v547 = vcombine.low %v528, %v544
    %v548 = vcombine.high %v528, %v544
    %v549 = vcombine.low %v317, %v324
    %v551 = vunpack.c.l.s4 1983009808
    %v552 = vunpack.c.0.s8 %v551
    %v553 = vlaneseq
    %v554 = vshrl.u32 %v553, 7
    %v555 = vsub.s32 %v552, %v554
    %v556 = vrot.slane %v549, %v555
    %v557 = vcombine.low %v341, %v342
    %v559 = vunpack.c.l.s4 1983009808
    %v560 = vunpack.c.0.s8 %v559
    %v561 = vlaneseq
    %v562 = vshrl.u32 %v561, 7
    %v563 = vsub.s32 %v560, %v562
    %v564 = vrot.slane %v557, %v563
    %v565 = vcombine.low %v333, %v340
    %v567 = vunpack.c.l.s4 1983009808
    %v568 = vunpack.c.0.s8 %v567
    %v569 = vlaneseq
    %v570 = vshrl.u32 %v569, 7
    %v571 = vsub.s32 %v568, %v570
    %v572 = vrot.slane %v565, %v571
    %v573 = vcombine.low %v343, %v344
    %v575 = vunpack.c.l.s4 1983009808
    %v576 = vunpack.c.0.s8 %v575
    %v577 = vlaneseq
    %v578 = vshrl.u32 %v577, 7
    %v579 = vsub.s32 %v576, %v578
    %v580 = vrot.slane %v573, %v579
    %v581 = vcombine.low %v556, %v564
    %v582 = vcombine.high %v556, %v564
    %v584 = vunpack.c.l.s4 1934713408
    %v585 = vunpack.c.0.s8 %v584
    %v586 = vlaneseq
    %v587 = vshrl.u32 %v586, 7
    %v588 = vsub.s32 %v585, %v587
    %v589 = vrot.slane %v581, %v588
    %v591 = vunpack.c.l.s4 1934713408
    %v592 = vunpack.c.0.s8 %v591
    %v593 = vlaneseq
    %v594 = vshrl.u32 %v593, 7
    %v595 = vsub.s32 %v592, %v594
    %v596 = vrot.slane %v582, %v595
    %v597 = vcombine.low %v572, %v580
    %v598 = vcombine.high %v572, %v580
    %v600 = vunpack.c.l.s4 1934713408
    %v601 = vunpack.c.0.s8 %v600
    %v602 = vlaneseq
    %v603 = vshrl.u32 %v602, 7
    %v604 = vsub.s32 %v601, %v603
    %v605 = vrot.slane %v597, %v604
    %v607 = vunpack.c.l.s4 1934713408
    %v608 = vunpack.c.0.s8 %v607
    %v609 = vlaneseq
    %v610 = vshrl.u32 %v609, 7
    %v611 = vsub.s32 %v608, %v610
    %v612 = vrot.slane %v598, %v611
    %v613 = vcombine.low %v589, %v605
    %v614 = vcombine.high %v589, %v605
    %v615 = vcombine.low %v596, %v612
    %v616 = vcombine.high %v596, %v612
    %v617 = vcombine.low %v385, %v392
    %v619 = vunpack.c.l.s4 1983009808
    %v620 = vunpack.c.0.s8 %v619
    %v621 = vlaneseq
    %v622 = vshrl.u32 %v621, 7
    %v623 = vsub.s32 %v620, %v622
    %v624 = vrot.slane %v617, %v623
    %v625 = vcombine.low %v409, %v410
    %v627 = vunpack.c.l.s4 1983009808
    %v628 = vunpack.c.0.s8 %v627
    %v629 = vlaneseq
    %v630 = vshrl.u32 %v629, 7
    %v631 = vsub.s32 %v628, %v630
    %v632 = vrot.slane %v625, %v631
    %v633 = vcombine.low %v401, %v408
    %v635 = vunpack.c.l.s4 1983009808
    %v636 = vunpack.c.0.s8 %v635
    %v637 = vlaneseq
    %v638 = vshrl.u32 %v637, 7
    %v639 = vsub.s32 %v636, %v638
    %v640 = vrot.slane %v633, %v639
    %v641 = vcombine.low %v411, %v412
    %v643 = vunpack.c.l.s4 1983009808
    %v644 = vunpack.c.0.s8 %v643
    %v645 = vlaneseq
    %v646 = vshrl.u32 %v645, 7
    %v647 = vsub.s32 %v644, %v646
    %v648 = vrot.slane %v641, %v647
    %v649 = vcombine.low %v624, %v632
    %v650 = vcombine.high %v624, %v632
    %v652 = vunpack.c.l.s4 1934713408
    %v653 = vunpack.c.0.s8 %v652
    %v654 = vlaneseq
    %v655 = vshrl.u32 %v654, 7
    %v656 = vsub.s32 %v653, %v655
    %v657 = vrot.slane %v649, %v656
    %v659 = vunpack.c.l.s4 1934713408
    %v660 = vunpack.c.0.s8 %v659
    %v661 = vlaneseq
    %v662 = vshrl.u32 %v661, 7
    %v663 = vsub.s32 %v660, %v662
    %v664 = vrot.slane %v650, %v663
    %v665 = vcombine.low %v640, %v648
    %v666 = vcombine.high %v640, %v648
    %v668 = vunpack.c.l.s4 1934713408
    %v669 = vunpack.c.0.s8 %v668
    %v670 = vlaneseq
    %v671 = vshrl.u32 %v670, 7
    %v672 = vsub.s32 %v669, %v671
    %v673 = vrot.slane %v665, %v672
    %v675 = vunpack.c.l.s4 1934713408
    %v676 = vunpack.c.0.s8 %v675
    %v677 = vlaneseq
    %v678 = vshrl.u32 %v677, 7
    %v679 = vsub.s32 %v676, %v678
    %v680 = vrot.slane %v666, %v679
    %v681 = vcombine.low %v657, %v673
    %v682 = vcombine.high %v657, %v673
    %v683 = vcombine.low %v664, %v680
    %v684 = vcombine.high %v664, %v680
    %v685 = vcombine.low %v453, %v460
    %v687 = vunpack.c.l.s4 1983009808
    %v688 = vunpack.c.0.s8 %v687
    %v689 = vlaneseq
    %v690 = vshrl.u32 %v689, 7
    %v691 = vsub.s32 %v688, %v690
    %v692 = vrot.slane %v685, %v691
    %v693 = vcombine.low %v477, %v478
    %v695 = vunpack.c.l.s4 1983009808
    %v696 = vunpack.c.0.s8 %v695
    %v697 = vlaneseq
    %v698 = vshrl.u32 %v697, 7
    %v699 = vsub.s32 %v696, %v698
    %v700 = vrot.slane %v693, %v699
    %v701 = vcombine.low %v469, %v476
    %v703 = vunpack.c.l.s4 1983009808
    %v704 = vunpack.c.0.s8 %v703
    %v705 = vlaneseq
    %v706 = vshrl.u32 %v705, 7
    %v707 = vsub.s32 %v704, %v706
    %v708 = vrot.slane %v701, %v707
    %v709 = vcombine.low %v479, %v480
    %v711 = vunpack.c.l.s4 1983009808
    %v712 = vunpack.c.0.s8 %v711
    %v713 = vlaneseq
    %v714 = vshrl.u32 %v713, 7
    %v715 = vsub.s32 %v712, %v714
    %v716 = vrot.slane %v709, %v715
    %v717 = vcombine.low %v692, %v700
    %v718 = vcombine.high %v692, %v700
    %v720 = vunpack.c.l.s4 1934713408
    %v721 = vunpack.c.0.s8 %v720
    %v722 = vlaneseq
    %v723 = vshrl.u32 %v722, 7
    %v724 = vsub.s32 %v721, %v723
    %v725 = vrot.slane %v717, %v724
    %v727 = vunpack.c.l.s4 1934713408
    %v728 = vunpack.c.0.s8 %v727
    %v729 = vlaneseq
    %v730 = vshrl.u32 %v729, 7
    %v731 = vsub.s32 %v728, %v730
    %v732 = vrot.slane %v718, %v731
    %v733 = vcombine.low %v708, %v716
    %v734 = vcombine.high %v708, %v716
    %v736 = vunpack.c.l.s4 1934713408
    %v737 = vunpack.c.0.s8 %v736
    %v738 = vlaneseq
    %v739 = vshrl.u32 %v738, 7
    %v740 = vsub.s32 %v737, %v739
    %v741 = vrot.slane %v733, %v740
    %v743 = vunpack.c.l.s4 1934713408
    %v744 = vunpack.c.0.s8 %v743
    %v745 = vlaneseq
    %v746 = vshrl.u32 %v745, 7
    %v747 = vsub.s32 %v744, %v746
    %v748 = vrot.slane %v734, %v747
    %v749 = vcombine.low %v725, %v741
    %v750 = vcombine.high %v725, %v741
    %v751 = vcombine.low %v732, %v748
    %v752 = vcombine.high %v732, %v748
    %v753 = vpack.c.bf16 %v613, %v545
    %v754 = vpack.c.bf16 %v614, %v546
    %v755 = vpack.c.bf16 %v615, %v547
    %v756 = vpack.c.bf16 %v616, %v548
    %v757 = vpack.c.bf16 %v749, %v681
    %v758 = vpack.c.bf16 %v750, %v682
    %v759 = vpack.c.bf16 %v751, %v683
    %v760 = vpack.c.bf16 %v752, %v684
    %761 = vrot.lane.b32.xlu0 %v155, 96
    %v762 = vpop.permute.xlu0 %761
    %763 = vrot.lane.b32.xlu0 %v158, 96
    %v764 = vpop.permute.xlu0 %763
    %765 = vrot.lane.b32.xlu0 %v163, 96
    %v766 = vpop.permute.xlu0 %765
    %767 = vrot.lane.b32.xlu0 %v166, 96
    %v768 = vpop.permute.xlu0 %767
    %769 = vrot.lane.b32.xlu0 %v174, 96
    %v770 = vpop.permute.xlu0 %769
    %771 = vrot.lane.b32.xlu0 %v176, 96
    %v772 = vpop.permute.xlu0 %771
    %773 = vrot.lane.b32.xlu0 %v178, 96
    %v774 = vpop.permute.xlu0 %773
    %775 = vrot.lane.b32.xlu0 %v180, 96
    %v776 = vpop.permute.xlu0 %775
    %777 = vrot.lane.b32.xlu0 %v186, 96
    %v778 = vpop.permute.xlu0 %777
    %779 = vrot.lane.b32.xlu0 %v188, 96
    %v780 = vpop.permute.xlu0 %779
    %781 = vrot.lane.b32.xlu0 %v190, 96
    %v782 = vpop.permute.xlu0 %781
    %783 = vrot.lane.b32.xlu0 %v192, 96
    %v784 = vpop.permute.xlu0 %783
    %785 = vrot.lane.b32.xlu0 %v198, 96
    %v786 = vpop.permute.xlu0 %785
    %787 = vrot.lane.b32.xlu0 %v200, 96
    %v788 = vpop.permute.xlu0 %787
    %789 = vrot.lane.b32.xlu0 %v202, 96
    %v790 = vpop.permute.xlu0 %789
    %791 = vrot.lane.b32.xlu0 %v204, 96
    %v792 = vpop.permute.xlu0 %791
    %v809 = vcombine.low %v762, %v778
    %v810 = vcombine.high %v762, %v778
    %v812 = vunpack.c.l.s4 1983009808
    %v813 = vunpack.c.0.s8 %v812
    %v814 = vlaneseq
    %v815 = vshrl.u32 %v814, 7
    %v816 = vsub.s32 %v813, %v815
    %v817 = vrot.slane %v809, %v816
    %v819 = vunpack.c.l.s4 1983009808
    %v820 = vunpack.c.0.s8 %v819
    %v821 = vlaneseq
    %v822 = vshrl.u32 %v821, 7
    %v823 = vsub.s32 %v820, %v822
    %v824 = vrot.slane %v810, %v823
    %v825 = vcombine.low %v770, %v786
    %v826 = vcombine.high %v770, %v786
    %v828 = vunpack.c.l.s4 1983009808
    %v829 = vunpack.c.0.s8 %v828
    %v830 = vlaneseq
    %v831 = vshrl.u32 %v830, 7
    %v832 = vsub.s32 %v829, %v831
    %v833 = vrot.slane %v825, %v832
    %v835 = vunpack.c.l.s4 1983009808
    %v836 = vunpack.c.0.s8 %v835
    %v837 = vlaneseq
    %v838 = vshrl.u32 %v837, 7
    %v839 = vsub.s32 %v836, %v838
    %v840 = vrot.slane %v826, %v839
    %v841 = vcombine.low %v817, %v833
    %v842 = vcombine.high %v817, %v833
    %v844 = vunpack.c.l.s4 1934713408
    %v845 = vunpack.c.0.s8 %v844
    %v846 = vlaneseq
    %v847 = vshrl.u32 %v846, 7
    %v848 = vsub.s32 %v845, %v847
    %v849 = vrot.slane %v841, %v848
    %v851 = vunpack.c.l.s4 1934713408
    %v852 = vunpack.c.0.s8 %v851
    %v853 = vlaneseq
    %v854 = vshrl.u32 %v853, 7
    %v855 = vsub.s32 %v852, %v854
    %v856 = vrot.slane %v842, %v855
    %v857 = vcombine.low %v824, %v840
    %v858 = vcombine.high %v824, %v840
    %v860 = vunpack.c.l.s4 1934713408
    %v861 = vunpack.c.0.s8 %v860
    %v862 = vlaneseq
    %v863 = vshrl.u32 %v862, 7
    %v864 = vsub.s32 %v861, %v863
    %v865 = vrot.slane %v857, %v864
    %v867 = vunpack.c.l.s4 1934713408
    %v868 = vunpack.c.0.s8 %v867
    %v869 = vlaneseq
    %v870 = vshrl.u32 %v869, 7
    %v871 = vsub.s32 %v868, %v870
    %v872 = vrot.slane %v858, %v871
    %v873 = vcombine.high %v849, 0.0
    %v874 = vcombine.high %v856, 0.0
    %v875 = vcombine.high %v865, 0.0
    %v876 = vcombine.high %v872, 0.0
    %v877 = vcombine.low %v764, %v780
    %v878 = vcombine.high %v764, %v780
    %v880 = vunpack.c.l.s4 1983009808
    %v881 = vunpack.c.0.s8 %v880
    %v882 = vlaneseq
    %v883 = vshrl.u32 %v882, 7
    %v884 = vsub.s32 %v881, %v883
    %v885 = vrot.slane %v877, %v884
    %v887 = vunpack.c.l.s4 1983009808
    %v888 = vunpack.c.0.s8 %v887
    %v889 = vlaneseq
    %v890 = vshrl.u32 %v889, 7
    %v891 = vsub.s32 %v888, %v890
    %v892 = vrot.slane %v878, %v891
    %v893 = vcombine.low %v772, %v788
    %v894 = vcombine.high %v772, %v788
    %v896 = vunpack.c.l.s4 1983009808
    %v897 = vunpack.c.0.s8 %v896
    %v898 = vlaneseq
    %v899 = vshrl.u32 %v898, 7
    %v900 = vsub.s32 %v897, %v899
    %v901 = vrot.slane %v893, %v900
    %v903 = vunpack.c.l.s4 1983009808
    %v904 = vunpack.c.0.s8 %v903
    %v905 = vlaneseq
    %v906 = vshrl.u32 %v905, 7
    %v907 = vsub.s32 %v904, %v906
    %v908 = vrot.slane %v894, %v907
    %v909 = vcombine.low %v885, %v901
    %v910 = vcombine.high %v885, %v901
    %v912 = vunpack.c.l.s4 1934713408
    %v913 = vunpack.c.0.s8 %v912
    %v914 = vlaneseq
    %v915 = vshrl.u32 %v914, 7
    %v916 = vsub.s32 %v913, %v915
    %v917 = vrot.slane %v909, %v916
    %v919 = vunpack.c.l.s4 1934713408
    %v920 = vunpack.c.0.s8 %v919
    %v921 = vlaneseq
    %v922 = vshrl.u32 %v921, 7
    %v923 = vsub.s32 %v920, %v922
    %v924 = vrot.slane %v910, %v923
    %v925 = vcombine.low %v892, %v908
    %v926 = vcombine.high %v892, %v908
    %v928 = vunpack.c.l.s4 1934713408
    %v929 = vunpack.c.0.s8 %v928
    %v930 = vlaneseq
    %v931 = vshrl.u32 %v930, 7
    %v932 = vsub.s32 %v929, %v931
    %v933 = vrot.slane %v925, %v932
    %v935 = vunpack.c.l.s4 1934713408
    %v936 = vunpack.c.0.s8 %v935
    %v937 = vlaneseq
    %v938 = vshrl.u32 %v937, 7
    %v939 = vsub.s32 %v936, %v938
    %v940 = vrot.slane %v926, %v939
    %v941 = vcombine.high %v917, 0.0
    %v942 = vcombine.high %v924, 0.0
    %v943 = vcombine.high %v933, 0.0
    %v944 = vcombine.high %v940, 0.0
    %v945 = vcombine.low %v766, %v782
    %v946 = vcombine.high %v766, %v782
    %v948 = vunpack.c.l.s4 1983009808
    %v949 = vunpack.c.0.s8 %v948
    %v950 = vlaneseq
    %v951 = vshrl.u32 %v950, 7
    %v952 = vsub.s32 %v949, %v951
    %v953 = vrot.slane %v945, %v952
    %v955 = vunpack.c.l.s4 1983009808
    %v956 = vunpack.c.0.s8 %v955
    %v957 = vlaneseq
    %v958 = vshrl.u32 %v957, 7
    %v959 = vsub.s32 %v956, %v958
    %v960 = vrot.slane %v946, %v959
    %v961 = vcombine.low %v774, %v790
    %v962 = vcombine.high %v774, %v790
    %v964 = vunpack.c.l.s4 1983009808
    %v965 = vunpack.c.0.s8 %v964
    %v966 = vlaneseq
    %v967 = vshrl.u32 %v966, 7
    %v968 = vsub.s32 %v965, %v967
    %v969 = vrot.slane %v961, %v968
    %v971 = vunpack.c.l.s4 1983009808
    %v972 = vunpack.c.0.s8 %v971
    %v973 = vlaneseq
    %v974 = vshrl.u32 %v973, 7
    %v975 = vsub.s32 %v972, %v974
    %v976 = vrot.slane %v962, %v975
    %v977 = vcombine.low %v953, %v969
    %v978 = vcombine.high %v953, %v969
    %v980 = vunpack.c.l.s4 1934713408
    %v981 = vunpack.c.0.s8 %v980
    %v982 = vlaneseq
    %v983 = vshrl.u32 %v982, 7
    %v984 = vsub.s32 %v981, %v983
    %v985 = vrot.slane %v977, %v984
    %v987 = vunpack.c.l.s4 1934713408
    %v988 = vunpack.c.0.s8 %v987
    %v989 = vlaneseq
    %v990 = vshrl.u32 %v989, 7
    %v991 = vsub.s32 %v988, %v990
    %v992 = vrot.slane %v978, %v991
    %v993 = vcombine.low %v960, %v976
    %v994 = vcombine.high %v960, %v976
    %v996 = vunpack.c.l.s4 1934713408
    %v997 = vunpack.c.0.s8 %v996
    %v998 = vlaneseq
    %v999 = vshrl.u32 %v998, 7
    %v1000 = vsub.s32 %v997, %v999
    %v1001 = vrot.slane %v993, %v1000
    %v1003 = vunpack.c.l.s4 1934713408
    %v1004 = vunpack.c.0.s8 %v1003
    %v1005 = vlaneseq
    %v1006 = vshrl.u32 %v1005, 7
    %v1007 = vsub.s32 %v1004, %v1006
    %v1008 = vrot.slane %v994, %v1007
    %v1009 = vcombine.high %v985, 0.0
    %v1010 = vcombine.high %v992, 0.0
    %v1011 = vcombine.high %v1001, 0.0
    %v1012 = vcombine.high %v1008, 0.0
    %v1013 = vcombine.low %v768, %v784
    %v1014 = vcombine.high %v768, %v784
    %v1016 = vunpack.c.l.s4 1983009808
    %v1017 = vunpack.c.0.s8 %v1016
    %v1018 = vlaneseq
    %v1019 = vshrl.u32 %v1018, 7
    %v1020 = vsub.s32 %v1017, %v1019
    %v1021 = vrot.slane %v1013, %v1020
    %v1023 = vunpack.c.l.s4 1983009808
    %v1024 = vunpack.c.0.s8 %v1023
    %v1025 = vlaneseq
    %v1026 = vshrl.u32 %v1025, 7
    %v1027 = vsub.s32 %v1024, %v1026
    %v1028 = vrot.slane %v1014, %v1027
    %v1029 = vcombine.low %v776, %v792
    %v1030 = vcombine.high %v776, %v792
    %v1032 = vunpack.c.l.s4 1983009808
    %v1033 = vunpack.c.0.s8 %v1032
    %v1034 = vlaneseq
    %v1035 = vshrl.u32 %v1034, 7
    %v1036 = vsub.s32 %v1033, %v1035
    %v1037 = vrot.slane %v1029, %v1036
    %v1039 = vunpack.c.l.s4 1983009808
    %v1040 = vunpack.c.0.s8 %v1039
    %v1041 = vlaneseq
    %v1042 = vshrl.u32 %v1041, 7
    %v1043 = vsub.s32 %v1040, %v1042
    %v1044 = vrot.slane %v1030, %v1043
    %v1045 = vcombine.low %v1021, %v1037
    %v1046 = vcombine.high %v1021, %v1037
    %v1048 = vunpack.c.l.s4 1934713408
    %v1049 = vunpack.c.0.s8 %v1048
    %v1050 = vlaneseq
    %v1051 = vshrl.u32 %v1050, 7
    %v1052 = vsub.s32 %v1049, %v1051
    %v1053 = vrot.slane %v1045, %v1052
    %v1055 = vunpack.c.l.s4 1934713408
    %v1056 = vunpack.c.0.s8 %v1055
    %v1057 = vlaneseq
    %v1058 = vshrl.u32 %v1057, 7
    %v1059 = vsub.s32 %v1056, %v1058
    %v1060 = vrot.slane %v1046, %v1059
    %v1061 = vcombine.low %v1028, %v1044
    %v1062 = vcombine.high %v1028, %v1044
    %v1064 = vunpack.c.l.s4 1934713408
    %v1065 = vunpack.c.0.s8 %v1064
    %v1066 = vlaneseq
    %v1067 = vshrl.u32 %v1066, 7
    %v1068 = vsub.s32 %v1065, %v1067
    %v1069 = vrot.slane %v1061, %v1068
    %v1071 = vunpack.c.l.s4 1934713408
    %v1072 = vunpack.c.0.s8 %v1071
    %v1073 = vlaneseq
    %v1074 = vshrl.u32 %v1073, 7
    %v1075 = vsub.s32 %v1072, %v1074
    %v1076 = vrot.slane %v1062, %v1075
    %v1077 = vcombine.high %v1053, 0.0
    %v1078 = vcombine.high %v1060, 0.0
    %v1079 = vcombine.high %v1069, 0.0
    %v1080 = vcombine.high %v1076, 0.0
    %v1081 = vcombine.low %v849, %v856
    %v1083 = vunpack.c.l.s4 1983009808
    %v1084 = vunpack.c.0.s8 %v1083
    %v1085 = vlaneseq
    %v1086 = vshrl.u32 %v1085, 7
    %v1087 = vsub.s32 %v1084, %v1086
    %v1088 = vrot.slane %v1081, %v1087
    %v1089 = vcombine.low %v873, %v874
    %v1091 = vunpack.c.l.s4 1983009808
    %v1092 = vunpack.c.0.s8 %v1091
    %v1093 = vlaneseq
    %v1094 = vshrl.u32 %v1093, 7
    %v1095 = vsub.s32 %v1092, %v1094
    %v1096 = vrot.slane %v1089, %v1095
    %v1097 = vcombine.low %v865, %v872
    %v1099 = vunpack.c.l.s4 1983009808
    %v1100 = vunpack.c.0.s8 %v1099
    %v1101 = vlaneseq
    %v1102 = vshrl.u32 %v1101, 7
    %v1103 = vsub.s32 %v1100, %v1102
    %v1104 = vrot.slane %v1097, %v1103
    %v1105 = vcombine.low %v875, %v876
    %v1107 = vunpack.c.l.s4 1983009808
    %v1108 = vunpack.c.0.s8 %v1107
    %v1109 = vlaneseq
    %v1110 = vshrl.u32 %v1109, 7
    %v1111 = vsub.s32 %v1108, %v1110
    %v1112 = vrot.slane %v1105, %v1111
    %v1113 = vcombine.low %v1088, %v1096
    %v1114 = vcombine.high %v1088, %v1096
    %v1116 = vunpack.c.l.s4 1934713408
    %v1117 = vunpack.c.0.s8 %v1116
    %v1118 = vlaneseq
    %v1119 = vshrl.u32 %v1118, 7
    %v1120 = vsub.s32 %v1117, %v1119
    %v1121 = vrot.slane %v1113, %v1120
    %v1123 = vunpack.c.l.s4 1934713408
    %v1124 = vunpack.c.0.s8 %v1123
    %v1125 = vlaneseq
    %v1126 = vshrl.u32 %v1125, 7
    %v1127 = vsub.s32 %v1124, %v1126
    %v1128 = vrot.slane %v1114, %v1127
    %v1129 = vcombine.low %v1104, %v1112
    %v1130 = vcombine.high %v1104, %v1112
    %v1132 = vunpack.c.l.s4 1934713408
    %v1133 = vunpack.c.0.s8 %v1132
    %v1134 = vlaneseq
    %v1135 = vshrl.u32 %v1134, 7
    %v1136 = vsub.s32 %v1133, %v1135
    %v1137 = vrot.slane %v1129, %v1136
    %v1139 = vunpack.c.l.s4 1934713408
    %v1140 = vunpack.c.0.s8 %v1139
    %v1141 = vlaneseq
    %v1142 = vshrl.u32 %v1141, 7
    %v1143 = vsub.s32 %v1140, %v1142
    %v1144 = vrot.slane %v1130, %v1143
    %v1145 = vcombine.low %v1121, %v1137
    %v1146 = vcombine.high %v1121, %v1137
    %v1147 = vcombine.low %v1128, %v1144
    %v1148 = vcombine.high %v1128, %v1144
    %v1149 = vcombine.low %v917, %v924
    %v1151 = vunpack.c.l.s4 1983009808
    %v1152 = vunpack.c.0.s8 %v1151
    %v1153 = vlaneseq
    %v1154 = vshrl.u32 %v1153, 7
    %v1155 = vsub.s32 %v1152, %v1154
    %v1156 = vrot.slane %v1149, %v1155
    %v1157 = vcombine.low %v941, %v942
    %v1159 = vunpack.c.l.s4 1983009808
    %v1160 = vunpack.c.0.s8 %v1159
    %v1161 = vlaneseq
    %v1162 = vshrl.u32 %v1161, 7
    %v1163 = vsub.s32 %v1160, %v1162
    %v1164 = vrot.slane %v1157, %v1163
    %v1165 = vcombine.low %v933, %v940
    %v1167 = vunpack.c.l.s4 1983009808
    %v1168 = vunpack.c.0.s8 %v1167
    %v1169 = vlaneseq
    %v1170 = vshrl.u32 %v1169, 7
    %v1171 = vsub.s32 %v1168, %v1170
    %v1172 = vrot.slane %v1165, %v1171
    %v1173 = vcombine.low %v943, %v944
    %v1175 = vunpack.c.l.s4 1983009808
    %v1176 = vunpack.c.0.s8 %v1175
    %v1177 = vlaneseq
    %v1178 = vshrl.u32 %v1177, 7
    %v1179 = vsub.s32 %v1176, %v1178
    %v1180 = vrot.slane %v1173, %v1179
    %v1181 = vcombine.low %v1156, %v1164
    %v1182 = vcombine.high %v1156, %v1164
    %v1184 = vunpack.c.l.s4 1934713408
    %v1185 = vunpack.c.0.s8 %v1184
    %v1186 = vlaneseq
    %v1187 = vshrl.u32 %v1186, 7
    %v1188 = vsub.s32 %v1185, %v1187
    %v1189 = vrot.slane %v1181, %v1188
    %v1191 = vunpack.c.l.s4 1934713408
    %v1192 = vunpack.c.0.s8 %v1191
    %v1193 = vlaneseq
    %v1194 = vshrl.u32 %v1193, 7
    %v1195 = vsub.s32 %v1192, %v1194
    %v1196 = vrot.slane %v1182, %v1195
    %v1197 = vcombine.low %v1172, %v1180
    %v1198 = vcombine.high %v1172, %v1180
    %v1200 = vunpack.c.l.s4 1934713408
    %v1201 = vunpack.c.0.s8 %v1200
    %v1202 = vlaneseq
    %v1203 = vshrl.u32 %v1202, 7
    %v1204 = vsub.s32 %v1201, %v1203
    %v1205 = vrot.slane %v1197, %v1204
    %v1207 = vunpack.c.l.s4 1934713408
    %v1208 = vunpack.c.0.s8 %v1207
    %v1209 = vlaneseq
    %v1210 = vshrl.u32 %v1209, 7
    %v1211 = vsub.s32 %v1208, %v1210
    %v1212 = vrot.slane %v1198, %v1211
    %v1213 = vcombine.low %v1189, %v1205
    %v1214 = vcombine.high %v1189, %v1205
    %v1215 = vcombine.low %v1196, %v1212
    %v1216 = vcombine.high %v1196, %v1212
    %v1217 = vcombine.low %v985, %v992
    %v1219 = vunpack.c.l.s4 1983009808
    %v1220 = vunpack.c.0.s8 %v1219
    %v1221 = vlaneseq
    %v1222 = vshrl.u32 %v1221, 7
    %v1223 = vsub.s32 %v1220, %v1222
    %v1224 = vrot.slane %v1217, %v1223
    %v1225 = vcombine.low %v1009, %v1010
    %v1227 = vunpack.c.l.s4 1983009808
    %v1228 = vunpack.c.0.s8 %v1227
    %v1229 = vlaneseq
    %v1230 = vshrl.u32 %v1229, 7
    %v1231 = vsub.s32 %v1228, %v1230
    %v1232 = vrot.slane %v1225, %v1231
    %v1233 = vcombine.low %v1001, %v1008
    %v1235 = vunpack.c.l.s4 1983009808
    %v1236 = vunpack.c.0.s8 %v1235
    %v1237 = vlaneseq
    %v1238 = vshrl.u32 %v1237, 7
    %v1239 = vsub.s32 %v1236, %v1238
    %v1240 = vrot.slane %v1233, %v1239
    %v1241 = vcombine.low %v1011, %v1012
    %v1243 = vunpack.c.l.s4 1983009808
    %v1244 = vunpack.c.0.s8 %v1243
    %v1245 = vlaneseq
    %v1246 = vshrl.u32 %v1245, 7
    %v1247 = vsub.s32 %v1244, %v1246
    %v1248 = vrot.slane %v1241, %v1247
    %v1249 = vcombine.low %v1224, %v1232
    %v1250 = vcombine.high %v1224, %v1232
    %v1252 = vunpack.c.l.s4 1934713408
    %v1253 = vunpack.c.0.s8 %v1252
    %v1254 = vlaneseq
    %v1255 = vshrl.u32 %v1254, 7
    %v1256 = vsub.s32 %v1253, %v1255
    %v1257 = vrot.slane %v1249, %v1256
    %v1259 = vunpack.c.l.s4 1934713408
    %v1260 = vunpack.c.0.s8 %v1259
    %v1261 = vlaneseq
    %v1262 = vshrl.u32 %v1261, 7
    %v1263 = vsub.s32 %v1260, %v1262
    %v1264 = vrot.slane %v1250, %v1263
    %v1265 = vcombine.low %v1240, %v1248
    %v1266 = vcombine.high %v1240, %v1248
    %v1268 = vunpack.c.l.s4 1934713408
    %v1269 = vunpack.c.0.s8 %v1268
    %v1270 = vlaneseq
    %v1271 = vshrl.u32 %v1270, 7
    %v1272 = vsub.s32 %v1269, %v1271
    %v1273 = vrot.slane %v1265, %v1272
    %v1275 = vunpack.c.l.s4 1934713408
    %v1276 = vunpack.c.0.s8 %v1275
    %v1277 = vlaneseq
    %v1278 = vshrl.u32 %v1277, 7
    %v1279 = vsub.s32 %v1276, %v1278
    %v1280 = vrot.slane %v1266, %v1279
    %v1281 = vcombine.low %v1257, %v1273
    %v1282 = vcombine.high %v1257, %v1273
    %v1283 = vcombine.low %v1264, %v1280
    %v1284 = vcombine.high %v1264, %v1280
    %v1285 = vcombine.low %v1053, %v1060
    %v1287 = vunpack.c.l.s4 1983009808
    %v1288 = vunpack.c.0.s8 %v1287
    %v1289 = vlaneseq
    %v1290 = vshrl.u32 %v1289, 7
    %v1291 = vsub.s32 %v1288, %v1290
    %v1292 = vrot.slane %v1285, %v1291
    %v1293 = vcombine.low %v1077, %v1078
    %v1295 = vunpack.c.l.s4 1983009808
    %v1296 = vunpack.c.0.s8 %v1295
    %v1297 = vlaneseq
    %v1298 = vshrl.u32 %v1297, 7
    %v1299 = vsub.s32 %v1296, %v1298
    %v1300 = vrot.slane %v1293, %v1299
    %v1301 = vcombine.low %v1069, %v1076
    %v1303 = vunpack.c.l.s4 1983009808
    %v1304 = vunpack.c.0.s8 %v1303
    %v1305 = vlaneseq
    %v1306 = vshrl.u32 %v1305, 7
    %v1307 = vsub.s32 %v1304, %v1306
    %v1308 = vrot.slane %v1301, %v1307
    %v1309 = vcombine.low %v1079, %v1080
    %v1311 = vunpack.c.l.s4 1983009808
    %v1312 = vunpack.c.0.s8 %v1311
    %v1313 = vlaneseq
    %v1314 = vshrl.u32 %v1313, 7
    %v1315 = vsub.s32 %v1312, %v1314
    %v1316 = vrot.slane %v1309, %v1315
    %v1317 = vcombine.low %v1292, %v1300
    %v1318 = vcombine.high %v1292, %v1300
    %v1320 = vunpack.c.l.s4 1934713408
    %v1321 = vunpack.c.0.s8 %v1320
    %v1322 = vlaneseq
    %v1323 = vshrl.u32 %v1322, 7
    %v1324 = vsub.s32 %v1321, %v1323
    %v1325 = vrot.slane %v1317, %v1324
    %v1327 = vunpack.c.l.s4 1934713408
    %v1328 = vunpack.c.0.s8 %v1327
    %v1329 = vlaneseq
    %v1330 = vshrl.u32 %v1329, 7
    %v1331 = vsub.s32 %v1328, %v1330
    %v1332 = vrot.slane %v1318, %v1331
    %v1333 = vcombine.low %v1308, %v1316
    %v1334 = vcombine.high %v1308, %v1316
    %v1336 = vunpack.c.l.s4 1934713408
    %v1337 = vunpack.c.0.s8 %v1336
    %v1338 = vlaneseq
    %v1339 = vshrl.u32 %v1338, 7
    %v1340 = vsub.s32 %v1337, %v1339
    %v1341 = vrot.slane %v1333, %v1340
    %v1343 = vunpack.c.l.s4 1934713408
    %v1344 = vunpack.c.0.s8 %v1343
    %v1345 = vlaneseq
    %v1346 = vshrl.u32 %v1345, 7
    %v1347 = vsub.s32 %v1344, %v1346
    %v1348 = vrot.slane %v1334, %v1347
    %v1349 = vcombine.low %v1325, %v1341
    %v1350 = vcombine.high %v1325, %v1341
    %v1351 = vcombine.low %v1332, %v1348
    %v1352 = vcombine.high %v1332, %v1348
    %v1353 = vpack.c.bf16 %v1213, %v1145
    %v1354 = vpack.c.bf16 %v1214, %v1146
    %v1355 = vpack.c.bf16 %v1215, %v1147
    %v1356 = vpack.c.bf16 %v1216, %v1148
    %v1357 = vpack.c.bf16 %v1349, %v1281
    %v1358 = vpack.c.bf16 %v1350, %v1282
    %v1359 = vpack.c.bf16 %v1351, %v1283
    %v1360 = vpack.c.bf16 %v1352, %v1284
    %1361 = vrot.lane.b32.xlu0 %v155, 64
    %v1362 = vpop.permute.xlu0 %1361
    %1363 = vrot.lane.b32.xlu0 %v158, 64
    %v1364 = vpop.permute.xlu0 %1363
    %1365 = vrot.lane.b32.xlu0 %v163, 64
    %v1366 = vpop.permute.xlu0 %1365
    %1367 = vrot.lane.b32.xlu0 %v166, 64
    %v1368 = vpop.permute.xlu0 %1367
    %1369 = vrot.lane.b32.xlu0 %v174, 64
    %v1370 = vpop.permute.xlu0 %1369
    %1371 = vrot.lane.b32.xlu0 %v176, 64
    %v1372 = vpop.permute.xlu0 %1371
    %1373 = vrot.lane.b32.xlu0 %v178, 64
    %v1374 = vpop.permute.xlu0 %1373
    %1375 = vrot.lane.b32.xlu0 %v180, 64
    %v1376 = vpop.permute.xlu0 %1375
    %1377 = vrot.lane.b32.xlu0 %v186, 64
    %v1378 = vpop.permute.xlu0 %1377
    %1379 = vrot.lane.b32.xlu0 %v188, 64
    %v1380 = vpop.permute.xlu0 %1379
    %1381 = vrot.lane.b32.xlu0 %v190, 64
    %v1382 = vpop.permute.xlu0 %1381
    %1383 = vrot.lane.b32.xlu0 %v192, 64
    %v1384 = vpop.permute.xlu0 %1383
    %1385 = vrot.lane.b32.xlu0 %v198, 64
    %v1386 = vpop.permute.xlu0 %1385
    %1387 = vrot.lane.b32.xlu0 %v200, 64
    %v1388 = vpop.permute.xlu0 %1387
    %1389 = vrot.lane.b32.xlu0 %v202, 64
    %v1390 = vpop.permute.xlu0 %1389
    %1391 = vrot.lane.b32.xlu0 %v204, 64
    %v1392 = vpop.permute.xlu0 %1391
    %v1409 = vcombine.low %v1362, %v1378
    %v1410 = vcombine.high %v1362, %v1378
    %v1412 = vunpack.c.l.s4 1983009808
    %v1413 = vunpack.c.0.s8 %v1412
    %v1414 = vlaneseq
    %v1415 = vshrl.u32 %v1414, 7
    %v1416 = vsub.s32 %v1413, %v1415
    %v1417 = vrot.slane %v1409, %v1416
    %v1419 = vunpack.c.l.s4 1983009808
    %v1420 = vunpack.c.0.s8 %v1419
    %v1421 = vlaneseq
    %v1422 = vshrl.u32 %v1421, 7
    %v1423 = vsub.s32 %v1420, %v1422
    %v1424 = vrot.slane %v1410, %v1423
    %v1425 = vcombine.low %v1370, %v1386
    %v1426 = vcombine.high %v1370, %v1386
    %v1428 = vunpack.c.l.s4 1983009808
    %v1429 = vunpack.c.0.s8 %v1428
    %v1430 = vlaneseq
    %v1431 = vshrl.u32 %v1430, 7
    %v1432 = vsub.s32 %v1429, %v1431
    %v1433 = vrot.slane %v1425, %v1432
    %v1435 = vunpack.c.l.s4 1983009808
    %v1436 = vunpack.c.0.s8 %v1435
    %v1437 = vlaneseq
    %v1438 = vshrl.u32 %v1437, 7
    %v1439 = vsub.s32 %v1436, %v1438
    %v1440 = vrot.slane %v1426, %v1439
    %v1441 = vcombine.low %v1417, %v1433
    %v1442 = vcombine.high %v1417, %v1433
    %v1444 = vunpack.c.l.s4 1934713408
    %v1445 = vunpack.c.0.s8 %v1444
    %v1446 = vlaneseq
    %v1447 = vshrl.u32 %v1446, 7
    %v1448 = vsub.s32 %v1445, %v1447
    %v1449 = vrot.slane %v1441, %v1448
    %v1451 = vunpack.c.l.s4 1934713408
    %v1452 = vunpack.c.0.s8 %v1451
    %v1453 = vlaneseq
    %v1454 = vshrl.u32 %v1453, 7
    %v1455 = vsub.s32 %v1452, %v1454
    %v1456 = vrot.slane %v1442, %v1455
    %v1457 = vcombine.low %v1424, %v1440
    %v1458 = vcombine.high %v1424, %v1440
    %v1460 = vunpack.c.l.s4 1934713408
    %v1461 = vunpack.c.0.s8 %v1460
    %v1462 = vlaneseq
    %v1463 = vshrl.u32 %v1462, 7
    %v1464 = vsub.s32 %v1461, %v1463
    %v1465 = vrot.slane %v1457, %v1464
    %v1467 = vunpack.c.l.s4 1934713408
    %v1468 = vunpack.c.0.s8 %v1467
    %v1469 = vlaneseq
    %v1470 = vshrl.u32 %v1469, 7
    %v1471 = vsub.s32 %v1468, %v1470
    %v1472 = vrot.slane %v1458, %v1471
    %v1473 = vcombine.high %v1449, 0.0
    %v1474 = vcombine.high %v1456, 0.0
    %v1475 = vcombine.high %v1465, 0.0
    %v1476 = vcombine.high %v1472, 0.0
    %v1477 = vcombine.low %v1364, %v1380
    %v1478 = vcombine.high %v1364, %v1380
    %v1480 = vunpack.c.l.s4 1983009808
    %v1481 = vunpack.c.0.s8 %v1480
    %v1482 = vlaneseq
    %v1483 = vshrl.u32 %v1482, 7
    %v1484 = vsub.s32 %v1481, %v1483
    %v1485 = vrot.slane %v1477, %v1484
    %v1487 = vunpack.c.l.s4 1983009808
    %v1488 = vunpack.c.0.s8 %v1487
    %v1489 = vlaneseq
    %v1490 = vshrl.u32 %v1489, 7
    %v1491 = vsub.s32 %v1488, %v1490
    %v1492 = vrot.slane %v1478, %v1491
    %v1493 = vcombine.low %v1372, %v1388
    %v1494 = vcombine.high %v1372, %v1388
    %v1496 = vunpack.c.l.s4 1983009808
    %v1497 = vunpack.c.0.s8 %v1496
    %v1498 = vlaneseq
    %v1499 = vshrl.u32 %v1498, 7
    %v1500 = vsub.s32 %v1497, %v1499
    %v1501 = vrot.slane %v1493, %v1500
    %v1503 = vunpack.c.l.s4 1983009808
    %v1504 = vunpack.c.0.s8 %v1503
    %v1505 = vlaneseq
    %v1506 = vshrl.u32 %v1505, 7
    %v1507 = vsub.s32 %v1504, %v1506
    %v1508 = vrot.slane %v1494, %v1507
    %v1509 = vcombine.low %v1485, %v1501
    %v1510 = vcombine.high %v1485, %v1501
    %v1512 = vunpack.c.l.s4 1934713408
    %v1513 = vunpack.c.0.s8 %v1512
    %v1514 = vlaneseq
    %v1515 = vshrl.u32 %v1514, 7
    %v1516 = vsub.s32 %v1513, %v1515
    %v1517 = vrot.slane %v1509, %v1516
    %v1519 = vunpack.c.l.s4 1934713408
    %v1520 = vunpack.c.0.s8 %v1519
    %v1521 = vlaneseq
    %v1522 = vshrl.u32 %v1521, 7
    %v1523 = vsub.s32 %v1520, %v1522
    %v1524 = vrot.slane %v1510, %v1523
    %v1525 = vcombine.low %v1492, %v1508
    %v1526 = vcombine.high %v1492, %v1508
    %v1528 = vunpack.c.l.s4 1934713408
    %v1529 = vunpack.c.0.s8 %v1528
    %v1530 = vlaneseq
    %v1531 = vshrl.u32 %v1530, 7
    %v1532 = vsub.s32 %v1529, %v1531
    %v1533 = vrot.slane %v1525, %v1532
    %v1535 = vunpack.c.l.s4 1934713408
    %v1536 = vunpack.c.0.s8 %v1535
    %v1537 = vlaneseq
    %v1538 = vshrl.u32 %v1537, 7
    %v1539 = vsub.s32 %v1536, %v1538
    %v1540 = vrot.slane %v1526, %v1539
    %v1541 = vcombine.high %v1517, 0.0
    %v1542 = vcombine.high %v1524, 0.0
    %v1543 = vcombine.high %v1533, 0.0
    %v1544 = vcombine.high %v1540, 0.0
    %v1545 = vcombine.low %v1366, %v1382
    %v1546 = vcombine.high %v1366, %v1382
    %v1548 = vunpack.c.l.s4 1983009808
    %v1549 = vunpack.c.0.s8 %v1548
    %v1550 = vlaneseq
    %v1551 = vshrl.u32 %v1550, 7
    %v1552 = vsub.s32 %v1549, %v1551
    %v1553 = vrot.slane %v1545, %v1552
    %v1555 = vunpack.c.l.s4 1983009808
    %v1556 = vunpack.c.0.s8 %v1555
    %v1557 = vlaneseq
    %v1558 = vshrl.u32 %v1557, 7
    %v1559 = vsub.s32 %v1556, %v1558
    %v1560 = vrot.slane %v1546, %v1559
    %v1561 = vcombine.low %v1374, %v1390
    %v1562 = vcombine.high %v1374, %v1390
    %v1564 = vunpack.c.l.s4 1983009808
    %v1565 = vunpack.c.0.s8 %v1564
    %v1566 = vlaneseq
    %v1567 = vshrl.u32 %v1566, 7
    %v1568 = vsub.s32 %v1565, %v1567
    %v1569 = vrot.slane %v1561, %v1568
    %v1571 = vunpack.c.l.s4 1983009808
    %v1572 = vunpack.c.0.s8 %v1571
    %v1573 = vlaneseq
    %v1574 = vshrl.u32 %v1573, 7
    %v1575 = vsub.s32 %v1572, %v1574
    %v1576 = vrot.slane %v1562, %v1575
    %v1577 = vcombine.low %v1553, %v1569
    %v1578 = vcombine.high %v1553, %v1569
    %v1580 = vunpack.c.l.s4 1934713408
    %v1581 = vunpack.c.0.s8 %v1580
    %v1582 = vlaneseq
    %v1583 = vshrl.u32 %v1582, 7
    %v1584 = vsub.s32 %v1581, %v1583
    %v1585 = vrot.slane %v1577, %v1584
    %v1587 = vunpack.c.l.s4 1934713408
    %v1588 = vunpack.c.0.s8 %v1587
    %v1589 = vlaneseq
    %v1590 = vshrl.u32 %v1589, 7
    %v1591 = vsub.s32 %v1588, %v1590
    %v1592 = vrot.slane %v1578, %v1591
    %v1593 = vcombine.low %v1560, %v1576
    %v1594 = vcombine.high %v1560, %v1576
    %v1596 = vunpack.c.l.s4 1934713408
    %v1597 = vunpack.c.0.s8 %v1596
    %v1598 = vlaneseq
    %v1599 = vshrl.u32 %v1598, 7
    %v1600 = vsub.s32 %v1597, %v1599
    %v1601 = vrot.slane %v1593, %v1600
    %v1603 = vunpack.c.l.s4 1934713408
    %v1604 = vunpack.c.0.s8 %v1603
    %v1605 = vlaneseq
    %v1606 = vshrl.u32 %v1605, 7
    %v1607 = vsub.s32 %v1604, %v1606
    %v1608 = vrot.slane %v1594, %v1607
    %v1609 = vcombine.high %v1585, 0.0
    %v1610 = vcombine.high %v1592, 0.0
    %v1611 = vcombine.high %v1601, 0.0
    %v1612 = vcombine.high %v1608, 0.0
    %v1613 = vcombine.low %v1368, %v1384
    %v1614 = vcombine.high %v1368, %v1384
    %v1616 = vunpack.c.l.s4 1983009808
    %v1617 = vunpack.c.0.s8 %v1616
    %v1618 = vlaneseq
    %v1619 = vshrl.u32 %v1618, 7
    %v1620 = vsub.s32 %v1617, %v1619
    %v1621 = vrot.slane %v1613, %v1620
    %v1623 = vunpack.c.l.s4 1983009808
    %v1624 = vunpack.c.0.s8 %v1623
    %v1625 = vlaneseq
    %v1626 = vshrl.u32 %v1625, 7
    %v1627 = vsub.s32 %v1624, %v1626
    %v1628 = vrot.slane %v1614, %v1627
    %v1629 = vcombine.low %v1376, %v1392
    %v1630 = vcombine.high %v1376, %v1392
    %v1632 = vunpack.c.l.s4 1983009808
    %v1633 = vunpack.c.0.s8 %v1632
    %v1634 = vlaneseq
    %v1635 = vshrl.u32 %v1634, 7
    %v1636 = vsub.s32 %v1633, %v1635
    %v1637 = vrot.slane %v1629, %v1636
    %v1639 = vunpack.c.l.s4 1983009808
    %v1640 = vunpack.c.0.s8 %v1639
    %v1641 = vlaneseq
    %v1642 = vshrl.u32 %v1641, 7
    %v1643 = vsub.s32 %v1640, %v1642
    %v1644 = vrot.slane %v1630, %v1643
    %v1645 = vcombine.low %v1621, %v1637
    %v1646 = vcombine.high %v1621, %v1637
    %v1648 = vunpack.c.l.s4 1934713408
    %v1649 = vunpack.c.0.s8 %v1648
    %v1650 = vlaneseq
    %v1651 = vshrl.u32 %v1650, 7
    %v1652 = vsub.s32 %v1649, %v1651
    %v1653 = vrot.slane %v1645, %v1652
    %v1655 = vunpack.c.l.s4 1934713408
    %v1656 = vunpack.c.0.s8 %v1655
    %v1657 = vlaneseq
    %v1658 = vshrl.u32 %v1657, 7
    %v1659 = vsub.s32 %v1656, %v1658
    %v1660 = vrot.slane %v1646, %v1659
    %v1661 = vcombine.low %v1628, %v1644
    %v1662 = vcombine.high %v1628, %v1644
    %v1664 = vunpack.c.l.s4 1934713408
    %v1665 = vunpack.c.0.s8 %v1664
    %v1666 = vlaneseq
    %v1667 = vshrl.u32 %v1666, 7
    %v1668 = vsub.s32 %v1665, %v1667
    %v1669 = vrot.slane %v1661, %v1668
    %v1671 = vunpack.c.l.s4 1934713408
    %v1672 = vunpack.c.0.s8 %v1671
    %v1673 = vlaneseq
    %v1674 = vshrl.u32 %v1673, 7
    %v1675 = vsub.s32 %v1672, %v1674
    %v1676 = vrot.slane %v1662, %v1675
    %v1677 = vcombine.high %v1653, 0.0
    %v1678 = vcombine.high %v1660, 0.0
    %v1679 = vcombine.high %v1669, 0.0
    %v1680 = vcombine.high %v1676, 0.0
    %v1681 = vcombine.low %v1449, %v1456
    %v1683 = vunpack.c.l.s4 1983009808
    %v1684 = vunpack.c.0.s8 %v1683
    %v1685 = vlaneseq
    %v1686 = vshrl.u32 %v1685, 7
    %v1687 = vsub.s32 %v1684, %v1686
    %v1688 = vrot.slane %v1681, %v1687
    %v1689 = vcombine.low %v1473, %v1474
    %v1691 = vunpack.c.l.s4 1983009808
    %v1692 = vunpack.c.0.s8 %v1691
    %v1693 = vlaneseq
    %v1694 = vshrl.u32 %v1693, 7
    %v1695 = vsub.s32 %v1692, %v1694
    %v1696 = vrot.slane %v1689, %v1695
    %v1697 = vcombine.low %v1465, %v1472
    %v1699 = vunpack.c.l.s4 1983009808
    %v1700 = vunpack.c.0.s8 %v1699
    %v1701 = vlaneseq
    %v1702 = vshrl.u32 %v1701, 7
    %v1703 = vsub.s32 %v1700, %v1702
    %v1704 = vrot.slane %v1697, %v1703
    %v1705 = vcombine.low %v1475, %v1476
    %v1707 = vunpack.c.l.s4 1983009808
    %v1708 = vunpack.c.0.s8 %v1707
    %v1709 = vlaneseq
    %v1710 = vshrl.u32 %v1709, 7
    %v1711 = vsub.s32 %v1708, %v1710
    %v1712 = vrot.slane %v1705, %v1711
    %v1713 = vcombine.low %v1688, %v1696
    %v1714 = vcombine.high %v1688, %v1696
    %v1716 = vunpack.c.l.s4 1934713408
    %v1717 = vunpack.c.0.s8 %v1716
    %v1718 = vlaneseq
    %v1719 = vshrl.u32 %v1718, 7
    %v1720 = vsub.s32 %v1717, %v1719
    %v1721 = vrot.slane %v1713, %v1720
    %v1723 = vunpack.c.l.s4 1934713408
    %v1724 = vunpack.c.0.s8 %v1723
    %v1725 = vlaneseq
    %v1726 = vshrl.u32 %v1725, 7
    %v1727 = vsub.s32 %v1724, %v1726
    %v1728 = vrot.slane %v1714, %v1727
    %v1729 = vcombine.low %v1704, %v1712
    %v1730 = vcombine.high %v1704, %v1712
    %v1732 = vunpack.c.l.s4 1934713408
    %v1733 = vunpack.c.0.s8 %v1732
    %v1734 = vlaneseq
    %v1735 = vshrl.u32 %v1734, 7
    %v1736 = vsub.s32 %v1733, %v1735
    %v1737 = vrot.slane %v1729, %v1736
    %v1739 = vunpack.c.l.s4 1934713408
    %v1740 = vunpack.c.0.s8 %v1739
    %v1741 = vlaneseq
    %v1742 = vshrl.u32 %v1741, 7
    %v1743 = vsub.s32 %v1740, %v1742
    %v1744 = vrot.slane %v1730, %v1743
    %v1745 = vcombine.low %v1721, %v1737
    %v1746 = vcombine.high %v1721, %v1737
    %v1747 = vcombine.low %v1728, %v1744
    %v1748 = vcombine.high %v1728, %v1744
    %v1749 = vcombine.low %v1517, %v1524
    %v1751 = vunpack.c.l.s4 1983009808
    %v1752 = vunpack.c.0.s8 %v1751
    %v1753 = vlaneseq
    %v1754 = vshrl.u32 %v1753, 7
    %v1755 = vsub.s32 %v1752, %v1754
    %v1756 = vrot.slane %v1749, %v1755
    %v1757 = vcombine.low %v1541, %v1542
    %v1759 = vunpack.c.l.s4 1983009808
    %v1760 = vunpack.c.0.s8 %v1759
    %v1761 = vlaneseq
    %v1762 = vshrl.u32 %v1761, 7
    %v1763 = vsub.s32 %v1760, %v1762
    %v1764 = vrot.slane %v1757, %v1763
    %v1765 = vcombine.low %v1533, %v1540
    %v1767 = vunpack.c.l.s4 1983009808
    %v1768 = vunpack.c.0.s8 %v1767
    %v1769 = vlaneseq
    %v1770 = vshrl.u32 %v1769, 7
    %v1771 = vsub.s32 %v1768, %v1770
    %v1772 = vrot.slane %v1765, %v1771
    %v1773 = vcombine.low %v1543, %v1544
    %v1775 = vunpack.c.l.s4 1983009808
    %v1776 = vunpack.c.0.s8 %v1775
    %v1777 = vlaneseq
    %v1778 = vshrl.u32 %v1777, 7
    %v1779 = vsub.s32 %v1776, %v1778
    %v1780 = vrot.slane %v1773, %v1779
    %v1781 = vcombine.low %v1756, %v1764
    %v1782 = vcombine.high %v1756, %v1764
    %v1784 = vunpack.c.l.s4 1934713408
    %v1785 = vunpack.c.0.s8 %v1784
    %v1786 = vlaneseq
    %v1787 = vshrl.u32 %v1786, 7
    %v1788 = vsub.s32 %v1785, %v1787
    %v1789 = vrot.slane %v1781, %v1788
    %v1791 = vunpack.c.l.s4 1934713408
    %v1792 = vunpack.c.0.s8 %v1791
    %v1793 = vlaneseq
    %v1794 = vshrl.u32 %v1793, 7
    %v1795 = vsub.s32 %v1792, %v1794
    %v1796 = vrot.slane %v1782, %v1795
    %v1797 = vcombine.low %v1772, %v1780
    %v1798 = vcombine.high %v1772, %v1780
    %v1800 = vunpack.c.l.s4 1934713408
    %v1801 = vunpack.c.0.s8 %v1800
    %v1802 = vlaneseq
    %v1803 = vshrl.u32 %v1802, 7
    %v1804 = vsub.s32 %v1801, %v1803
    %v1805 = vrot.slane %v1797, %v1804
    %v1807 = vunpack.c.l.s4 1934713408
    %v1808 = vunpack.c.0.s8 %v1807
    %v1809 = vlaneseq
    %v1810 = vshrl.u32 %v1809, 7
    %v1811 = vsub.s32 %v1808, %v1810
    %v1812 = vrot.slane %v1798, %v1811
    %v1813 = vcombine.low %v1789, %v1805
    %v1814 = vcombine.high %v1789, %v1805
    %v1815 = vcombine.low %v1796, %v1812
    %v1816 = vcombine.high %v1796, %v1812
    %v1817 = vcombine.low %v1585, %v1592
    %v1819 = vunpack.c.l.s4 1983009808
    %v1820 = vunpack.c.0.s8 %v1819
    %v1821 = vlaneseq
    %v1822 = vshrl.u32 %v1821, 7
    %v1823 = vsub.s32 %v1820, %v1822
    %v1824 = vrot.slane %v1817, %v1823
    %v1825 = vcombine.low %v1609, %v1610
    %v1827 = vunpack.c.l.s4 1983009808
    %v1828 = vunpack.c.0.s8 %v1827
    %v1829 = vlaneseq
    %v1830 = vshrl.u32 %v1829, 7
    %v1831 = vsub.s32 %v1828, %v1830
    %v1832 = vrot.slane %v1825, %v1831
    %v1833 = vcombine.low %v1601, %v1608
    %v1835 = vunpack.c.l.s4 1983009808
    %v1836 = vunpack.c.0.s8 %v1835
    %v1837 = vlaneseq
    %v1838 = vshrl.u32 %v1837, 7
    %v1839 = vsub.s32 %v1836, %v1838
    %v1840 = vrot.slane %v1833, %v1839
    %v1841 = vcombine.low %v1611, %v1612
    %v1843 = vunpack.c.l.s4 1983009808
    %v1844 = vunpack.c.0.s8 %v1843
    %v1845 = vlaneseq
    %v1846 = vshrl.u32 %v1845, 7
    %v1847 = vsub.s32 %v1844, %v1846
    %v1848 = vrot.slane %v1841, %v1847
    %v1849 = vcombine.low %v1824, %v1832
    %v1850 = vcombine.high %v1824, %v1832
    %v1852 = vunpack.c.l.s4 1934713408
    %v1853 = vunpack.c.0.s8 %v1852
    %v1854 = vlaneseq
    %v1855 = vshrl.u32 %v1854, 7
    %v1856 = vsub.s32 %v1853, %v1855
    %v1857 = vrot.slane %v1849, %v1856
    %v1859 = vunpack.c.l.s4 1934713408
    %v1860 = vunpack.c.0.s8 %v1859
    %v1861 = vlaneseq
    %v1862 = vshrl.u32 %v1861, 7
    %v1863 = vsub.s32 %v1860, %v1862
    %v1864 = vrot.slane %v1850, %v1863
    %v1865 = vcombine.low %v1840, %v1848
    %v1866 = vcombine.high %v1840, %v1848
    %v1868 = vunpack.c.l.s4 1934713408
    %v1869 = vunpack.c.0.s8 %v1868
    %v1870 = vlaneseq
    %v1871 = vshrl.u32 %v1870, 7
    %v1872 = vsub.s32 %v1869, %v1871
    %v1873 = vrot.slane %v1865, %v1872
    %v1875 = vunpack.c.l.s4 1934713408
    %v1876 = vunpack.c.0.s8 %v1875
    %v1877 = vlaneseq
    %v1878 = vshrl.u32 %v1877, 7
    %v1879 = vsub.s32 %v1876, %v1878
    %v1880 = vrot.slane %v1866, %v1879
    %v1881 = vcombine.low %v1857, %v1873
    %v1882 = vcombine.high %v1857, %v1873
    %v1883 = vcombine.low %v1864, %v1880
    %v1884 = vcombine.high %v1864, %v1880
    %v1885 = vcombine.low %v1653, %v1660
    %v1887 = vunpack.c.l.s4 1983009808
    %v1888 = vunpack.c.0.s8 %v1887
    %v1889 = vlaneseq
    %v1890 = vshrl.u32 %v1889, 7
    %v1891 = vsub.s32 %v1888, %v1890
    %v1892 = vrot.slane %v1885, %v1891
    %v1893 = vcombine.low %v1677, %v1678
    %v1895 = vunpack.c.l.s4 1983009808
    %v1896 = vunpack.c.0.s8 %v1895
    %v1897 = vlaneseq
    %v1898 = vshrl.u32 %v1897, 7
    %v1899 = vsub.s32 %v1896, %v1898
    %v1900 = vrot.slane %v1893, %v1899
    %v1901 = vcombine.low %v1669, %v1676
    %v1903 = vunpack.c.l.s4 1983009808
    %v1904 = vunpack.c.0.s8 %v1903
    %v1905 = vlaneseq
    %v1906 = vshrl.u32 %v1905, 7
    %v1907 = vsub.s32 %v1904, %v1906
    %v1908 = vrot.slane %v1901, %v1907
    %v1909 = vcombine.low %v1679, %v1680
    %v1911 = vunpack.c.l.s4 1983009808
    %v1912 = vunpack.c.0.s8 %v1911
    %v1913 = vlaneseq
    %v1914 = vshrl.u32 %v1913, 7
    %v1915 = vsub.s32 %v1912, %v1914
    %v1916 = vrot.slane %v1909, %v1915
    %v1917 = vcombine.low %v1892, %v1900
    %v1918 = vcombine.high %v1892, %v1900
    %v1920 = vunpack.c.l.s4 1934713408
    %v1921 = vunpack.c.0.s8 %v1920
    %v1922 = vlaneseq
    %v1923 = vshrl.u32 %v1922, 7
    %v1924 = vsub.s32 %v1921, %v1923
    %v1925 = vrot.slane %v1917, %v1924
    %v1927 = vunpack.c.l.s4 1934713408
    %v1928 = vunpack.c.0.s8 %v1927
    %v1929 = vlaneseq
    %v1930 = vshrl.u32 %v1929, 7
    %v1931 = vsub.s32 %v1928, %v1930
    %v1932 = vrot.slane %v1918, %v1931
    %v1933 = vcombine.low %v1908, %v1916
    %v1934 = vcombine.high %v1908, %v1916
    %v1936 = vunpack.c.l.s4 1934713408
    %v1937 = vunpack.c.0.s8 %v1936
    %v1938 = vlaneseq
    %v1939 = vshrl.u32 %v1938, 7
    %v1940 = vsub.s32 %v1937, %v1939
    %v1941 = vrot.slane %v1933, %v1940
    %v1943 = vunpack.c.l.s4 1934713408
    %v1944 = vunpack.c.0.s8 %v1943
    %v1945 = vlaneseq
    %v1946 = vshrl.u32 %v1945, 7
    %v1947 = vsub.s32 %v1944, %v1946
    %v1948 = vrot.slane %v1934, %v1947
    %v1949 = vcombine.low %v1925, %v1941
    %v1950 = vcombine.high %v1925, %v1941
    %v1951 = vcombine.low %v1932, %v1948
    %v1952 = vcombine.high %v1932, %v1948
    %v1953 = vpack.c.bf16 %v1813, %v1745
    %v1954 = vpack.c.bf16 %v1814, %v1746
    %v1955 = vpack.c.bf16 %v1815, %v1747
    %v1956 = vpack.c.bf16 %v1816, %v1748
    %v1957 = vpack.c.bf16 %v1949, %v1881
    %v1958 = vpack.c.bf16 %v1950, %v1882
    %v1959 = vpack.c.bf16 %v1951, %v1883
    %v1960 = vpack.c.bf16 %v1952, %v1884
    %vm1961 = vcmask 64512
    %v1963 = vsel %vm1961, %v753, 0
    %v1966 = vsel %vm1961, %v1353, 0
    %1968 = vmatprep.subr.bf16.mxu0 0
    %1969 = vmatpush1.bf16.xpose.msra.mxu0 %v1966
    %1970 = vmatprep.subr.bf16.mxu0 0
    %1971 = vmatpush1.bf16.xpose.msra.mxu0 0
    %1972 = vmatprep.subr.bf16.mxu0 0
    %1973 = vmatpush1.bf16.xpose.msra.mxu0 0
    %1974 = vmatprep.subr.bf16.mxu0 0
    %1975 = vmatpush1.bf16.xpose.msra.mxu0 0
    %1976 = vmatprep.subr.bf16.mxu0 0
    %1977 = vmatpush1.bf16.xpose.msra.mxu0 0
    %1978 = vmatprep.subr.bf16.mxu0 0
    %1979 = vmatpush1.bf16.xpose.msra.mxu0 0
    %1980 = vmatprep.subr.bf16.mxu0 0
    %1981 = vmatpush1.bf16.xpose.msra.mxu0 0
    %1982 = vmatprep.subr.bf16.mxu0 0
    %1983 = vmatpush1.bf16.xpose.msra.mxu0 0
    %1984 = vmatprep.subr.bf16.mxu0 0
    %1985 = vmatpush1.bf16.xpose.msra.mxu0 0
    %1986 = vmatprep.subr.bf16.mxu0 0
    %1987 = vmatpush1.bf16.xpose.msra.mxu0 0
    %1988 = vmatprep.subr.bf16.mxu0 0
    %1989 = vmatpush1.bf16.xpose.msra.mxu0 0
    %1990 = vmatprep.subr.bf16.mxu0 0
    %1991 = vmatpush1.bf16.xpose.msra.mxu0 0
    %1992 = vmatprep.subr.bf16.mxu0 0
    %1993 = vmatpush1.bf16.xpose.msra.mxu0 0
    %1994 = vmatprep.subr.bf16.mxu0 0
    %1995 = vmatpush1.bf16.xpose.msra.mxu0 0
    %1996 = vmatprep.subr.bf16.mxu0 0
    %1997 = vmatpush1.bf16.xpose.msra.mxu0 0
    %1998 = vmatprep.subr.bf16.mxu0 0
    %1999 = vmatpush1.bf16.xpose.msra.mxu0 0
    %2000 = vmatprep.mubr.bf16.mxu0 0
    %2001 = vmatmul.mubr.bf16.gmra.mrb[0].mxu0 %v1963
    %v2002 = vpop.f32.mrb[0].mxu0
    %v2003 = vadd.f32 0.0, %v2002
    %v2004 = vpop.f32.mrb[0].mxu0
    %v2005 = vpop.f32.mrb[0].mxu0
    %v2006 = vadd.f32 0.0, %v2005
    %v2007 = vpop.f32.mrb[0].mxu0
    %2008 = vdwg.mxu0
    %v2010 = vsel %vm1961, %v754, 0
    %v2013 = vsel %vm1961, %v1354, 0
    %2015 = vmatprep.subr.bf16.mxu0 0
    %2016 = vmatpush1.bf16.xpose.msra.mxu0 %v2013
    %2017 = vmatprep.subr.bf16.mxu0 0
    %2018 = vmatpush1.bf16.xpose.msra.mxu0 0
    %2019 = vmatprep.subr.bf16.mxu0 0
    %2020 = vmatpush1.bf16.xpose.msra.mxu0 0
    %2021 = vmatprep.subr.bf16.mxu0 0
    %2022 = vmatpush1.bf16.xpose.msra.mxu0 0
    %2023 = vmatprep.subr.bf16.mxu0 0
    %2024 = vmatpush1.bf16.xpose.msra.mxu0 0
    %2025 = vmatprep.subr.bf16.mxu0 0
    %2026 = vmatpush1.bf16.xpose.msra.mxu0 0
    %2027 = vmatprep.subr.bf16.mxu0 0
    %2028 = vmatpush1.bf16.xpose.msra.mxu0 0
    %2029 = vmatprep.subr.bf16.mxu0 0
    %2030 = vmatpush1.bf16.xpose.msra.mxu0 0
    %2031 = vmatprep.subr.bf16.mxu0 0
    %2032 = vmatpush1.bf16.xpose.msra.mxu0 0
    %2033 = vmatprep.subr.bf16.mxu0 0
    %2034 = vmatpush1.bf16.xpose.msra.mxu0 0
    %2035 = vmatprep.subr.bf16.mxu0 0
    %2036 = vmatpush1.bf16.xpose.msra.mxu0 0
    %2037 = vmatprep.subr.bf16.mxu0 0
    %2038 = vmatpush1.bf16.xpose.msra.mxu0 0
    %2039 = vmatprep.subr.bf16.mxu0 0
    %2040 = vmatpush1.bf16.xpose.msra.mxu0 0
    %2041 = vmatprep.subr.bf16.mxu0 0
    %2042 = vmatpush1.bf16.xpose.msra.mxu0 0
    %2043 = vmatprep.subr.bf16.mxu0 0
    %2044 = vmatpush1.bf16.xpose.msra.mxu0 0
    %2045 = vmatprep.subr.bf16.mxu0 0
    %2046 = vmatpush1.bf16.xpose.msra.mxu0 0
    %2047 = vmatprep.mubr.bf16.mxu0 0
    %2048 = vmatmul.mubr.bf16.gmra.mrb[0].mxu0 %v2010
    %v2049 = vpop.f32.mrb[0].mxu0
    %v2050 = vadd.f32 0.0, %v2049
    %v2051 = vpop.f32.mrb[0].mxu0
    %v2052 = vpop.f32.mrb[0].mxu0
    %v2053 = vadd.f32 0.0, %v2052
    %v2054 = vpop.f32.mrb[0].mxu0
    %2055 = vdwg.mxu0
    %v2057 = vsel %vm1961, %v755, 0
    %v2060 = vsel %vm1961, %v1355, 0
    %2062 = vmatprep.subr.bf16.mxu0 0
    %2063 = vmatpush1.bf16.xpose.msra.mxu0 %v2060
    %2064 = vmatprep.subr.bf16.mxu0 0
    %2065 = vmatpush1.bf16.xpose.msra.mxu0 0
    %2066 = vmatprep.subr.bf16.mxu0 0
    %2067 = vmatpush1.bf16.xpose.msra.mxu0 0
    %2068 = vmatprep.subr.bf16.mxu0 0
    %2069 = vmatpush1.bf16.xpose.msra.mxu0 0
    %2070 = vmatprep.subr.bf16.mxu0 0
    %2071 = vmatpush1.bf16.xpose.msra.mxu0 0
    %2072 = vmatprep.subr.bf16.mxu0 0
    %2073 = vmatpush1.bf16.xpose.msra.mxu0 0
    %2074 = vmatprep.subr.bf16.mxu0 0
    %2075 = vmatpush1.bf16.xpose.msra.mxu0 0
    %2076 = vmatprep.subr.bf16.mxu0 0
    %2077 = vmatpush1.bf16.xpose.msra.mxu0 0
    %2078 = vmatprep.subr.bf16.mxu0 0
    %2079 = vmatpush1.bf16.xpose.msra.mxu0 0
    %2080 = vmatprep.subr.bf16.mxu0 0
    %2081 = vmatpush1.bf16.xpose.msra.mxu0 0
    %2082 = vmatprep.subr.bf16.mxu0 0
    %2083 = vmatpush1.bf16.xpose.msra.mxu0 0
    %2084 = vmatprep.subr.bf16.mxu0 0
    %2085 = vmatpush1.bf16.xpose.msra.mxu0 0
    %2086 = vmatprep.subr.bf16.mxu0 0
    %2087 = vmatpush1.bf16.xpose.msra.mxu0 0
    %2088 = vmatprep.subr.bf16.mxu0 0
    %2089 = vmatpush1.bf16.xpose.msra.mxu0 0
    %2090 = vmatprep.subr.bf16.mxu0 0
    %2091 = vmatpush1.bf16.xpose.msra.mxu0 0
    %2092 = vmatprep.subr.bf16.mxu0 0
    %2093 = vmatpush1.bf16.xpose.msra.mxu0 0
    %2094 = vmatprep.mubr.bf16.mxu0 0
    %2095 = vmatmul.mubr.bf16.gmra.mrb[0].mxu0 %v2057
    %v2096 = vpop.f32.mrb[0].mxu0
    %v2097 = vadd.f32 0.0, %v2096
    %v2098 = vpop.f32.mrb[0].mxu0
    %v2099 = vpop.f32.mrb[0].mxu0
    %v2100 = vadd.f32 0.0, %v2099
    %v2101 = vpop.f32.mrb[0].mxu0
    %2102 = vdwg.mxu0
    %v2104 = vsel %vm1961, %v756, 0
    %v2107 = vsel %vm1961, %v1356, 0
    %2109 = vmatprep.subr.bf16.mxu0 0
    %2110 = vmatpush1.bf16.xpose.msra.mxu0 %v2107
    %2111 = vmatprep.subr.bf16.mxu0 0
    %2112 = vmatpush1.bf16.xpose.msra.mxu0 0
    %2113 = vmatprep.subr.bf16.mxu0 0
    %2114 = vmatpush1.bf16.xpose.msra.mxu0 0
    %2115 = vmatprep.subr.bf16.mxu0 0
    %2116 = vmatpush1.bf16.xpose.msra.mxu0 0
    %2117 = vmatprep.subr.bf16.mxu0 0
    %2118 = vmatpush1.bf16.xpose.msra.mxu0 0
    %2119 = vmatprep.subr.bf16.mxu0 0
    %2120 = vmatpush1.bf16.xpose.msra.mxu0 0
    %2121 = vmatprep.subr.bf16.mxu0 0
    %2122 = vmatpush1.bf16.xpose.msra.mxu0 0
    %2123 = vmatprep.subr.bf16.mxu0 0
    %2124 = vmatpush1.bf16.xpose.msra.mxu0 0
    %2125 = vmatprep.subr.bf16.mxu0 0
    %2126 = vmatpush1.bf16.xpose.msra.mxu0 0
    %2127 = vmatprep.subr.bf16.mxu0 0
    %2128 = vmatpush1.bf16.xpose.msra.mxu0 0
    %2129 = vmatprep.subr.bf16.mxu0 0
    %2130 = vmatpush1.bf16.xpose.msra.mxu0 0
    %2131 = vmatprep.subr.bf16.mxu0 0
    %2132 = vmatpush1.bf16.xpose.msra.mxu0 0
    %2133 = vmatprep.subr.bf16.mxu0 0
    %2134 = vmatpush1.bf16.xpose.msra.mxu0 0
    %2135 = vmatprep.subr.bf16.mxu0 0
    %2136 = vmatpush1.bf16.xpose.msra.mxu0 0
    %2137 = vmatprep.subr.bf16.mxu0 0
    %2138 = vmatpush1.bf16.xpose.msra.mxu0 0
    %2139 = vmatprep.subr.bf16.mxu0 0
    %2140 = vmatpush1.bf16.xpose.msra.mxu0 0
    %2141 = vmatprep.mubr.bf16.mxu0 0
    %2142 = vmatmul.mubr.bf16.gmra.mrb[0].mxu0 %v2104
    %v2143 = vpop.f32.mrb[0].mxu0
    %v2144 = vadd.f32 0.0, %v2143
    %v2145 = vpop.f32.mrb[0].mxu0
    %v2146 = vpop.f32.mrb[0].mxu0
    %v2147 = vadd.f32 0.0, %v2146
    %v2148 = vpop.f32.mrb[0].mxu0
    %2149 = vdwg.mxu0
    %v2151 = vsel %vm1961, %v757, 0
    %v2154 = vsel %vm1961, %v1357, 0
    %2156 = vmatprep.subr.bf16.mxu0 0
    %2157 = vmatpush1.bf16.xpose.msra.mxu0 %v2154
    %2158 = vmatprep.subr.bf16.mxu0 0
    %2159 = vmatpush1.bf16.xpose.msra.mxu0 0
    %2160 = vmatprep.subr.bf16.mxu0 0
    %2161 = vmatpush1.bf16.xpose.msra.mxu0 0
    %2162 = vmatprep.subr.bf16.mxu0 0
    %2163 = vmatpush1.bf16.xpose.msra.mxu0 0
    %2164 = vmatprep.subr.bf16.mxu0 0
    %2165 = vmatpush1.bf16.xpose.msra.mxu0 0
    %2166 = vmatprep.subr.bf16.mxu0 0
    %2167 = vmatpush1.bf16.xpose.msra.mxu0 0
    %2168 = vmatprep.subr.bf16.mxu0 0
    %2169 = vmatpush1.bf16.xpose.msra.mxu0 0
    %2170 = vmatprep.subr.bf16.mxu0 0
    %2171 = vmatpush1.bf16.xpose.msra.mxu0 0
    %2172 = vmatprep.subr.bf16.mxu0 0
    %2173 = vmatpush1.bf16.xpose.msra.mxu0 0
    %2174 = vmatprep.subr.bf16.mxu0 0
    %2175 = vmatpush1.bf16.xpose.msra.mxu0 0
    %2176 = vmatprep.subr.bf16.mxu0 0
    %2177 = vmatpush1.bf16.xpose.msra.mxu0 0
    %2178 = vmatprep.subr.bf16.mxu0 0
    %2179 = vmatpush1.bf16.xpose.msra.mxu0 0
    %2180 = vmatprep.subr.bf16.mxu0 0
    %2181 = vmatpush1.bf16.xpose.msra.mxu0 0
    %2182 = vmatprep.subr.bf16.mxu0 0
    %2183 = vmatpush1.bf16.xpose.msra.mxu0 0
    %2184 = vmatprep.subr.bf16.mxu0 0
    %2185 = vmatpush1.bf16.xpose.msra.mxu0 0
    %2186 = vmatprep.subr.bf16.mxu0 0
    %2187 = vmatpush1.bf16.xpose.msra.mxu0 0
    %2188 = vmatprep.mubr.bf16.mxu0 0
    %2189 = vmatmul.mubr.bf16.gmra.mrb[0].mxu0 %v2151
    %v2190 = vpop.f32.mrb[0].mxu0
    %v2191 = vadd.f32 0.0, %v2190
    %v2192 = vpop.f32.mrb[0].mxu0
    %v2193 = vpop.f32.mrb[0].mxu0
    %v2194 = vadd.f32 0.0, %v2193
    %v2195 = vpop.f32.mrb[0].mxu0
    %2196 = vdwg.mxu0
    %v2198 = vsel %vm1961, %v758, 0
    %v2201 = vsel %vm1961, %v1358, 0
    %2203 = vmatprep.subr.bf16.mxu0 0
    %2204 = vmatpush1.bf16.xpose.msra.mxu0 %v2201
    %2205 = vmatprep.subr.bf16.mxu0 0
    %2206 = vmatpush1.bf16.xpose.msra.mxu0 0
    %2207 = vmatprep.subr.bf16.mxu0 0
    %2208 = vmatpush1.bf16.xpose.msra.mxu0 0
    %2209 = vmatprep.subr.bf16.mxu0 0
    %2210 = vmatpush1.bf16.xpose.msra.mxu0 0
    %2211 = vmatprep.subr.bf16.mxu0 0
    %2212 = vmatpush1.bf16.xpose.msra.mxu0 0
    %2213 = vmatprep.subr.bf16.mxu0 0
    %2214 = vmatpush1.bf16.xpose.msra.mxu0 0
    %2215 = vmatprep.subr.bf16.mxu0 0
    %2216 = vmatpush1.bf16.xpose.msra.mxu0 0
    %2217 = vmatprep.subr.bf16.mxu0 0
    %2218 = vmatpush1.bf16.xpose.msra.mxu0 0
    %2219 = vmatprep.subr.bf16.mxu0 0
    %2220 = vmatpush1.bf16.xpose.msra.mxu0 0
    %2221 = vmatprep.subr.bf16.mxu0 0
    %2222 = vmatpush1.bf16.xpose.msra.mxu0 0
    %2223 = vmatprep.subr.bf16.mxu0 0
    %2224 = vmatpush1.bf16.xpose.msra.mxu0 0
    %2225 = vmatprep.subr.bf16.mxu0 0
    %2226 = vmatpush1.bf16.xpose.msra.mxu0 0
    %2227 = vmatprep.subr.bf16.mxu0 0
    %2228 = vmatpush1.bf16.xpose.msra.mxu0 0
    %2229 = vmatprep.subr.bf16.mxu0 0
    %2230 = vmatpush1.bf16.xpose.msra.mxu0 0
    %2231 = vmatprep.subr.bf16.mxu0 0
    %2232 = vmatpush1.bf16.xpose.msra.mxu0 0
    %2233 = vmatprep.subr.bf16.mxu0 0
    %2234 = vmatpush1.bf16.xpose.msra.mxu0 0
    %2235 = vmatprep.mubr.bf16.mxu0 0
    %2236 = vmatmul.mubr.bf16.gmra.mrb[0].mxu0 %v2198
    %v2237 = vpop.f32.mrb[0].mxu0
    %v2238 = vadd.f32 0.0, %v2237
    %v2239 = vpop.f32.mrb[0].mxu0
    %v2240 = vpop.f32.mrb[0].mxu0
    %v2241 = vadd.f32 0.0, %v2240
    %v2242 = vpop.f32.mrb[0].mxu0
    %2243 = vdwg.mxu0
    %v2245 = vsel %vm1961, %v759, 0
    %v2248 = vsel %vm1961, %v1359, 0
    %2250 = vmatprep.subr.bf16.mxu0 0
    %2251 = vmatpush1.bf16.xpose.msra.mxu0 %v2248
    %2252 = vmatprep.subr.bf16.mxu0 0
    %2253 = vmatpush1.bf16.xpose.msra.mxu0 0
    %2254 = vmatprep.subr.bf16.mxu0 0
    %2255 = vmatpush1.bf16.xpose.msra.mxu0 0
    %2256 = vmatprep.subr.bf16.mxu0 0
    %2257 = vmatpush1.bf16.xpose.msra.mxu0 0
    %2258 = vmatprep.subr.bf16.mxu0 0
    %2259 = vmatpush1.bf16.xpose.msra.mxu0 0
    %2260 = vmatprep.subr.bf16.mxu0 0
    %2261 = vmatpush1.bf16.xpose.msra.mxu0 0
    %2262 = vmatprep.subr.bf16.mxu0 0
    %2263 = vmatpush1.bf16.xpose.msra.mxu0 0
    %2264 = vmatprep.subr.bf16.mxu0 0
    %2265 = vmatpush1.bf16.xpose.msra.mxu0 0
    %2266 = vmatprep.subr.bf16.mxu0 0
    %2267 = vmatpush1.bf16.xpose.msra.mxu0 0
    %2268 = vmatprep.subr.bf16.mxu0 0
    %2269 = vmatpush1.bf16.xpose.msra.mxu0 0
    %2270 = vmatprep.subr.bf16.mxu0 0
    %2271 = vmatpush1.bf16.xpose.msra.mxu0 0
    %2272 = vmatprep.subr.bf16.mxu0 0
    %2273 = vmatpush1.bf16.xpose.msra.mxu0 0
    %2274 = vmatprep.subr.bf16.mxu0 0
    %2275 = vmatpush1.bf16.xpose.msra.mxu0 0
    %2276 = vmatprep.subr.bf16.mxu0 0
    %2277 = vmatpush1.bf16.xpose.msra.mxu0 0
    %2278 = vmatprep.subr.bf16.mxu0 0
    %2279 = vmatpush1.bf16.xpose.msra.mxu0 0
    %2280 = vmatprep.subr.bf16.mxu0 0
    %2281 = vmatpush1.bf16.xpose.msra.mxu0 0
    %2282 = vmatprep.mubr.bf16.mxu0 0
    %2283 = vmatmul.mubr.bf16.gmra.mrb[0].mxu0 %v2245
    %v2284 = vpop.f32.mrb[0].mxu0
    %v2285 = vadd.f32 0.0, %v2284
    %v2286 = vpop.f32.mrb[0].mxu0
    %v2287 = vpop.f32.mrb[0].mxu0
    %v2288 = vadd.f32 0.0, %v2287
    %v2289 = vpop.f32.mrb[0].mxu0
    %2290 = vdwg.mxu0
    %v2292 = vsel %vm1961, %v760, 0
    %v2295 = vsel %vm1961, %v1360, 0
    %2297 = vmatprep.subr.bf16.mxu0 0
    %2298 = vmatpush1.bf16.xpose.msra.mxu0 %v2295
    %2299 = vmatprep.subr.bf16.mxu0 0
    %2300 = vmatpush1.bf16.xpose.msra.mxu0 0
    %2301 = vmatprep.subr.bf16.mxu0 0
    %2302 = vmatpush1.bf16.xpose.msra.mxu0 0
    %2303 = vmatprep.subr.bf16.mxu0 0
    %2304 = vmatpush1.bf16.xpose.msra.mxu0 0
    %2305 = vmatprep.subr.bf16.mxu0 0
    %2306 = vmatpush1.bf16.xpose.msra.mxu0 0
    %2307 = vmatprep.subr.bf16.mxu0 0
    %2308 = vmatpush1.bf16.xpose.msra.mxu0 0
    %2309 = vmatprep.subr.bf16.mxu0 0
    %2310 = vmatpush1.bf16.xpose.msra.mxu0 0
    %2311 = vmatprep.subr.bf16.mxu0 0
    %2312 = vmatpush1.bf16.xpose.msra.mxu0 0
    %2313 = vmatprep.subr.bf16.mxu0 0
    %2314 = vmatpush1.bf16.xpose.msra.mxu0 0
    %2315 = vmatprep.subr.bf16.mxu0 0
    %2316 = vmatpush1.bf16.xpose.msra.mxu0 0
    %2317 = vmatprep.subr.bf16.mxu0 0
    %2318 = vmatpush1.bf16.xpose.msra.mxu0 0
    %2319 = vmatprep.subr.bf16.mxu0 0
    %2320 = vmatpush1.bf16.xpose.msra.mxu0 0
    %2321 = vmatprep.subr.bf16.mxu0 0
    %2322 = vmatpush1.bf16.xpose.msra.mxu0 0
    %2323 = vmatprep.subr.bf16.mxu0 0
    %2324 = vmatpush1.bf16.xpose.msra.mxu0 0
    %2325 = vmatprep.subr.bf16.mxu0 0
    %2326 = vmatpush1.bf16.xpose.msra.mxu0 0
    %2327 = vmatprep.subr.bf16.mxu0 0
    %2328 = vmatpush1.bf16.xpose.msra.mxu0 0
    %2329 = vmatprep.mubr.bf16.mxu0 0
    %2330 = vmatmul.mubr.bf16.gmra.mrb[0].mxu0 %v2292
    %v2331 = vpop.f32.mrb[0].mxu0
    %v2332 = vadd.f32 0.0, %v2331
    %v2333 = vpop.f32.mrb[0].mxu0
    %v2334 = vpop.f32.mrb[0].mxu0
    %v2335 = vadd.f32 0.0, %v2334
    %v2336 = vpop.f32.mrb[0].mxu0
    %2337 = vdwg.mxu0
    %vm2338 = vcmask 130048
    %v2339 = vsel %vm2338, %v2003, -inf
    %2340 = vmax.xlane.f32.xlu0 %v2339
    %v2341 = vpop.xlane.xlu0 %2340
    %v2342 = vsel %vm2338, %v2006, -inf
    %2343 = vmax.xlane.f32.xlu0 %v2342
    %v2344 = vpop.xlane.xlu0 %2343
    %v2345 = vsel %vm2338, %v2050, -inf
    %2346 = vmax.xlane.f32.xlu0 %v2345
    %v2347 = vpop.xlane.xlu0 %2346
    %v2348 = vsel %vm2338, %v2053, -inf
    %2349 = vmax.xlane.f32.xlu0 %v2348
    %v2350 = vpop.xlane.xlu0 %2349
    %v2351 = vsel %vm2338, %v2097, -inf
    %2352 = vmax.xlane.f32.xlu0 %v2351
    %v2353 = vpop.xlane.xlu0 %2352
    %v2354 = vsel %vm2338, %v2100, -inf
    %2355 = vmax.xlane.f32.xlu0 %v2354
    %v2356 = vpop.xlane.xlu0 %2355
    %v2357 = vsel %vm2338, %v2144, -inf
    %2358 = vmax.xlane.f32.xlu0 %v2357
    %v2359 = vpop.xlane.xlu0 %2358
    %v2360 = vsel %vm2338, %v2147, -inf
    %2361 = vmax.xlane.f32.xlu0 %v2360
    %v2362 = vpop.xlane.xlu0 %2361
    %v2363 = vsel %vm2338, %v2191, -inf
    %2364 = vmax.xlane.f32.xlu0 %v2363
    %v2365 = vpop.xlane.xlu0 %2364
    %v2366 = vsel %vm2338, %v2194, -inf
    %2367 = vmax.xlane.f32.xlu0 %v2366
    %v2368 = vpop.xlane.xlu0 %2367
    %v2369 = vsel %vm2338, %v2238, -inf
    %2370 = vmax.xlane.f32.xlu0 %v2369
    %v2371 = vpop.xlane.xlu0 %2370
    %v2372 = vsel %vm2338, %v2241, -inf
    %2373 = vmax.xlane.f32.xlu0 %v2372
    %v2374 = vpop.xlane.xlu0 %2373
    %v2375 = vsel %vm2338, %v2285, -inf
    %2376 = vmax.xlane.f32.xlu0 %v2375
    %v2377 = vpop.xlane.xlu0 %2376
    %v2378 = vsel %vm2338, %v2288, -inf
    %2379 = vmax.xlane.f32.xlu0 %v2378
    %v2380 = vpop.xlane.xlu0 %2379
    %v2381 = vsel %vm2338, %v2332, -inf
    %2382 = vmax.xlane.f32.xlu0 %v2381
    %v2383 = vpop.xlane.xlu0 %2382
    %v2384 = vsel %vm2338, %v2335, -inf
    %2385 = vmax.xlane.f32.xlu0 %v2384
    %v2386 = vpop.xlane.xlu0 %2385
    %v2387 = vsub.f32 %v2003, %v2341
    %v2388 = vsub.f32 %v2006, %v2344
    %v2389 = vsub.f32 %v2050, %v2347
    %v2390 = vsub.f32 %v2053, %v2350
    %v2391 = vsub.f32 %v2097, %v2353
    %v2392 = vsub.f32 %v2100, %v2356
    %v2393 = vsub.f32 %v2144, %v2359
    %v2394 = vsub.f32 %v2147, %v2362
    %v2395 = vsub.f32 %v2191, %v2365
    %v2396 = vsub.f32 %v2194, %v2368
    %v2397 = vsub.f32 %v2238, %v2371
    %v2398 = vsub.f32 %v2241, %v2374
    %v2399 = vsub.f32 %v2285, %v2377
    %v2400 = vsub.f32 %v2288, %v2380
    %v2401 = vsub.f32 %v2332, %v2383
    %v2402 = vsub.f32 %v2335, %v2386
    %v2403 = vmul.f32 %v2387, 1.442695
    %v2404 = vpow.pop %v2403
    %v2405 = vmul.f32 %v2388, 1.442695
    %v2406 = vpow.pop %v2405
    %v2407 = vmul.f32 %v2389, 1.442695
    %v2408 = vpow.pop %v2407
    %v2409 = vmul.f32 %v2390, 1.442695
    %v2410 = vpow.pop %v2409
    %v2411 = vmul.f32 %v2391, 1.442695
    %v2412 = vpow.pop %v2411
    %v2413 = vmul.f32 %v2392, 1.442695
    %v2414 = vpow.pop %v2413
    %v2415 = vmul.f32 %v2393, 1.442695
    %v2416 = vpow.pop %v2415
    %v2417 = vmul.f32 %v2394, 1.442695
    %v2418 = vpow.pop %v2417
    %v2419 = vmul.f32 %v2395, 1.442695
    %v2420 = vpow.pop %v2419
    %v2421 = vmul.f32 %v2396, 1.442695
    %v2422 = vpow.pop %v2421
    %v2423 = vmul.f32 %v2397, 1.442695
    %v2424 = vpow.pop %v2423
    %v2425 = vmul.f32 %v2398, 1.442695
    %v2426 = vpow.pop %v2425
    %v2427 = vmul.f32 %v2399, 1.442695
    %v2428 = vpow.pop %v2427
    %v2429 = vmul.f32 %v2400, 1.442695
    %v2430 = vpow.pop %v2429
    %v2431 = vmul.f32 %v2401, 1.442695
    %v2432 = vpow.pop %v2431
    %v2433 = vmul.f32 %v2402, 1.442695
    %v2434 = vpow.pop %v2433
    %v2435 = vsel %vm2338, %v2404, 0.0
    %2436 = vadd.xlane.f32.xlu0 %v2435
    %v2437 = vpop.xlane.xlu0 %2436
    %v2438 = vsel %vm2338, %v2406, 0.0
    %2439 = vadd.xlane.f32.xlu0 %v2438
    %v2440 = vpop.xlane.xlu0 %2439
    %v2441 = vsel %vm2338, %v2408, 0.0
    %2442 = vadd.xlane.f32.xlu0 %v2441
    %v2443 = vpop.xlane.xlu0 %2442
    %v2444 = vsel %vm2338, %v2410, 0.0
    %2445 = vadd.xlane.f32.xlu0 %v2444
    %v2446 = vpop.xlane.xlu0 %2445
    %v2447 = vsel %vm2338, %v2412, 0.0
    %2448 = vadd.xlane.f32.xlu0 %v2447
    %v2449 = vpop.xlane.xlu0 %2448
    %v2450 = vsel %vm2338, %v2414, 0.0
    %2451 = vadd.xlane.f32.xlu0 %v2450
    %v2452 = vpop.xlane.xlu0 %2451
    %v2453 = vsel %vm2338, %v2416, 0.0
    %2454 = vadd.xlane.f32.xlu0 %v2453
    %v2455 = vpop.xlane.xlu0 %2454
    %v2456 = vsel %vm2338, %v2418, 0.0
    %2457 = vadd.xlane.f32.xlu0 %v2456
    %v2458 = vpop.xlane.xlu0 %2457
    %v2459 = vsel %vm2338, %v2420, 0.0
    %2460 = vadd.xlane.f32.xlu0 %v2459
    %v2461 = vpop.xlane.xlu0 %2460
    %v2462 = vsel %vm2338, %v2422, 0.0
    %2463 = vadd.xlane.f32.xlu0 %v2462
    %v2464 = vpop.xlane.xlu0 %2463
    %v2465 = vsel %vm2338, %v2424, 0.0
    %2466 = vadd.xlane.f32.xlu0 %v2465
    %v2467 = vpop.xlane.xlu0 %2466
    %v2468 = vsel %vm2338, %v2426, 0.0
    %2469 = vadd.xlane.f32.xlu0 %v2468
    %v2470 = vpop.xlane.xlu0 %2469
    %v2471 = vsel %vm2338, %v2428, 0.0
    %2472 = vadd.xlane.f32.xlu0 %v2471
    %v2473 = vpop.xlane.xlu0 %2472
    %v2474 = vsel %vm2338, %v2430, 0.0
    %2475 = vadd.xlane.f32.xlu0 %v2474
    %v2476 = vpop.xlane.xlu0 %2475
    %v2477 = vsel %vm2338, %v2432, 0.0
    %2478 = vadd.xlane.f32.xlu0 %v2477
    %v2479 = vpop.xlane.xlu0 %2478
    %v2480 = vsel %vm2338, %v2434, 0.0
    %2481 = vadd.xlane.f32.xlu0 %v2480
    %v2482 = vpop.xlane.xlu0 %2481
    %v2483 = vrcp.pop %v2437
    %v2484 = vrcp.pop %v2440
    %v2485 = vrcp.pop %v2443
    %v2486 = vrcp.pop %v2446
    %v2487 = vrcp.pop %v2449
    %v2488 = vrcp.pop %v2452
    %v2489 = vrcp.pop %v2455
    %v2490 = vrcp.pop %v2458
    %v2491 = vrcp.pop %v2461
    %v2492 = vrcp.pop %v2464
    %v2493 = vrcp.pop %v2467
    %v2494 = vrcp.pop %v2470
    %v2495 = vrcp.pop %v2473
    %v2496 = vrcp.pop %v2476
    %v2497 = vrcp.pop %v2479
    %v2498 = vrcp.pop %v2482
    %v2499 = vmul.f32 %v2404, %v2483
    %v2500 = vmul.f32 %v2406, %v2484
    %v2501 = vmul.f32 %v2408, %v2485
    %v2502 = vmul.f32 %v2410, %v2486
    %v2503 = vmul.f32 %v2412, %v2487
    %v2504 = vmul.f32 %v2414, %v2488
    %v2505 = vmul.f32 %v2416, %v2489
    %v2506 = vmul.f32 %v2418, %v2490
    %v2507 = vmul.f32 %v2420, %v2491
    %v2508 = vmul.f32 %v2422, %v2492
    %v2509 = vmul.f32 %v2424, %v2493
    %v2510 = vmul.f32 %v2426, %v2494
    %v2511 = vmul.f32 %v2428, %v2495
    %v2512 = vmul.f32 %v2430, %v2496
    %v2513 = vmul.f32 %v2432, %v2497
    %v2514 = vmul.f32 %v2434, %v2498
    %v2515 = vpack.c.bf16 %v2500, %v2499
    %v2516 = vpack.c.bf16 %v2502, %v2501
    %v2517 = vpack.c.bf16 %v2504, %v2503
    %v2518 = vpack.c.bf16 %v2506, %v2505
    %v2519 = vpack.c.bf16 %v2508, %v2507
    %v2520 = vpack.c.bf16 %v2510, %v2509
    %v2521 = vpack.c.bf16 %v2512, %v2511
    %v2522 = vpack.c.bf16 %v2514, %v2513
    %v2524 = vsel %vm2338, %v2515, 0
    %2526 = vmatprep.subr.bf16.mxu0 0
    %2527 = vmatpush1.bf16.msra.mxu0 %v1953
    %2528 = vmatprep.subr.bf16.mxu0 0
    %2529 = vmatpush1.bf16.msra.mxu0 0
    %2530 = vmatprep.subr.bf16.mxu0 0
    %2531 = vmatpush1.bf16.msra.mxu0 0
    %2532 = vmatprep.subr.bf16.mxu0 0
    %2533 = vmatpush1.bf16.msra.mxu0 0
    %2534 = vmatprep.subr.bf16.mxu0 0
    %2535 = vmatpush1.bf16.msra.mxu0 0
    %2536 = vmatprep.subr.bf16.mxu0 0
    %2537 = vmatpush1.bf16.msra.mxu0 0
    %2538 = vmatprep.subr.bf16.mxu0 0
    %2539 = vmatpush1.bf16.msra.mxu0 0
    %2540 = vmatprep.subr.bf16.mxu0 0
    %2541 = vmatpush1.bf16.msra.mxu0 0
    %2542 = vmatprep.subr.bf16.mxu0 0
    %2543 = vmatpush1.bf16.msra.mxu0 0
    %2544 = vmatprep.subr.bf16.mxu0 0
    %2545 = vmatpush1.bf16.msra.mxu0 0
    %2546 = vmatprep.subr.bf16.mxu0 0
    %2547 = vmatpush1.bf16.msra.mxu0 0
    %2548 = vmatprep.subr.bf16.mxu0 0
    %2549 = vmatpush1.bf16.msra.mxu0 0
    %2550 = vmatprep.subr.bf16.mxu0 0
    %2551 = vmatpush1.bf16.msra.mxu0 0
    %2552 = vmatprep.subr.bf16.mxu0 0
    %2553 = vmatpush1.bf16.msra.mxu0 0
    %2554 = vmatprep.subr.bf16.mxu0 0
    %2555 = vmatpush1.bf16.msra.mxu0 0
    %2556 = vmatprep.subr.bf16.mxu0 0
    %2557 = vmatpush1.bf16.msra.mxu0 0
    %2558 = vmatprep.mubr.bf16.mxu0 0
    %2559 = vmatmul.mubr.bf16.gmra.mrb[0].mxu0 %v2524
    %v2560 = vpop.f32.mrb[0].mxu0
    %v2561 = vadd.f32 0.0, %v2560
    %v2562 = vpop.f32.mrb[0].mxu0
    %v2563 = vpop.f32.mrb[0].mxu0
    %v2564 = vadd.f32 0.0, %v2563
    %v2565 = vpop.f32.mrb[0].mxu0
    %2566 = vdwg.mxu0
    %v2568 = vsel %vm2338, %v2516, 0
    %2570 = vmatprep.subr.bf16.mxu0 0
    %2571 = vmatpush1.bf16.msra.mxu0 %v1954
    %2572 = vmatprep.subr.bf16.mxu0 0
    %2573 = vmatpush1.bf16.msra.mxu0 0
    %2574 = vmatprep.subr.bf16.mxu0 0
    %2575 = vmatpush1.bf16.msra.mxu0 0
    %2576 = vmatprep.subr.bf16.mxu0 0
    %2577 = vmatpush1.bf16.msra.mxu0 0
    %2578 = vmatprep.subr.bf16.mxu0 0
    %2579 = vmatpush1.bf16.msra.mxu0 0
    %2580 = vmatprep.subr.bf16.mxu0 0
    %2581 = vmatpush1.bf16.msra.mxu0 0
    %2582 = vmatprep.subr.bf16.mxu0 0
    %2583 = vmatpush1.bf16.msra.mxu0 0
    %2584 = vmatprep.subr.bf16.mxu0 0
    %2585 = vmatpush1.bf16.msra.mxu0 0
    %2586 = vmatprep.subr.bf16.mxu0 0
    %2587 = vmatpush1.bf16.msra.mxu0 0
    %2588 = vmatprep.subr.bf16.mxu0 0
    %2589 = vmatpush1.bf16.msra.mxu0 0
    %2590 = vmatprep.subr.bf16.mxu0 0
    %2591 = vmatpush1.bf16.msra.mxu0 0
    %2592 = vmatprep.subr.bf16.mxu0 0
    %2593 = vmatpush1.bf16.msra.mxu0 0
    %2594 = vmatprep.subr.bf16.mxu0 0
    %2595 = vmatpush1.bf16.msra.mxu0 0
    %2596 = vmatprep.subr.bf16.mxu0 0
    %2597 = vmatpush1.bf16.msra.mxu0 0
    %2598 = vmatprep.subr.bf16.mxu0 0
    %2599 = vmatpush1.bf16.msra.mxu0 0
    %2600 = vmatprep.subr.bf16.mxu0 0
    %2601 = vmatpush1.bf16.msra.mxu0 0
    %2602 = vmatprep.mubr.bf16.mxu0 0
    %2603 = vmatmul.mubr.bf16.gmra.mrb[0].mxu0 %v2568
    %v2604 = vpop.f32.mrb[0].mxu0
    %v2605 = vadd.f32 0.0, %v2604
    %v2606 = vpop.f32.mrb[0].mxu0
    %v2607 = vpop.f32.mrb[0].mxu0
    %v2608 = vadd.f32 0.0, %v2607
    %v2609 = vpop.f32.mrb[0].mxu0
    %2610 = vdwg.mxu0
    %v2612 = vsel %vm2338, %v2517, 0
    %2614 = vmatprep.subr.bf16.mxu0 0
    %2615 = vmatpush1.bf16.msra.mxu0 %v1955
    %2616 = vmatprep.subr.bf16.mxu0 0
    %2617 = vmatpush1.bf16.msra.mxu0 0
    %2618 = vmatprep.subr.bf16.mxu0 0
    %2619 = vmatpush1.bf16.msra.mxu0 0
    %2620 = vmatprep.subr.bf16.mxu0 0
    %2621 = vmatpush1.bf16.msra.mxu0 0
    %2622 = vmatprep.subr.bf16.mxu0 0
    %2623 = vmatpush1.bf16.msra.mxu0 0
    %2624 = vmatprep.subr.bf16.mxu0 0
    %2625 = vmatpush1.bf16.msra.mxu0 0
    %2626 = vmatprep.subr.bf16.mxu0 0
    %2627 = vmatpush1.bf16.msra.mxu0 0
    %2628 = vmatprep.subr.bf16.mxu0 0
    %2629 = vmatpush1.bf16.msra.mxu0 0
    %2630 = vmatprep.subr.bf16.mxu0 0
    %2631 = vmatpush1.bf16.msra.mxu0 0
    %2632 = vmatprep.subr.bf16.mxu0 0
    %2633 = vmatpush1.bf16.msra.mxu0 0
    %2634 = vmatprep.subr.bf16.mxu0 0
    %2635 = vmatpush1.bf16.msra.mxu0 0
    %2636 = vmatprep.subr.bf16.mxu0 0
    %2637 = vmatpush1.bf16.msra.mxu0 0
    %2638 = vmatprep.subr.bf16.mxu0 0
    %2639 = vmatpush1.bf16.msra.mxu0 0
    %2640 = vmatprep.subr.bf16.mxu0 0
    %2641 = vmatpush1.bf16.msra.mxu0 0
    %2642 = vmatprep.subr.bf16.mxu0 0
    %2643 = vmatpush1.bf16.msra.mxu0 0
    %2644 = vmatprep.subr.bf16.mxu0 0
    %2645 = vmatpush1.bf16.msra.mxu0 0
    %2646 = vmatprep.mubr.bf16.mxu0 0
    %2647 = vmatmul.mubr.bf16.gmra.mrb[0].mxu0 %v2612
    %v2648 = vpop.f32.mrb[0].mxu0
    %v2649 = vadd.f32 0.0, %v2648
    %v2650 = vpop.f32.mrb[0].mxu0
    %v2651 = vpop.f32.mrb[0].mxu0
    %v2652 = vadd.f32 0.0, %v2651
    %v2653 = vpop.f32.mrb[0].mxu0
    %2654 = vdwg.mxu0
    %v2656 = vsel %vm2338, %v2518, 0
    %2658 = vmatprep.subr.bf16.mxu0 0
    %2659 = vmatpush1.bf16.msra.mxu0 %v1956
    %2660 = vmatprep.subr.bf16.mxu0 0
    %2661 = vmatpush1.bf16.msra.mxu0 0
    %2662 = vmatprep.subr.bf16.mxu0 0
    %2663 = vmatpush1.bf16.msra.mxu0 0
    %2664 = vmatprep.subr.bf16.mxu0 0
    %2665 = vmatpush1.bf16.msra.mxu0 0
    %2666 = vmatprep.subr.bf16.mxu0 0
    %2667 = vmatpush1.bf16.msra.mxu0 0
    %2668 = vmatprep.subr.bf16.mxu0 0
    %2669 = vmatpush1.bf16.msra.mxu0 0
    %2670 = vmatprep.subr.bf16.mxu0 0
    %2671 = vmatpush1.bf16.msra.mxu0 0
    %2672 = vmatprep.subr.bf16.mxu0 0
    %2673 = vmatpush1.bf16.msra.mxu0 0
    %2674 = vmatprep.subr.bf16.mxu0 0
    %2675 = vmatpush1.bf16.msra.mxu0 0
    %2676 = vmatprep.subr.bf16.mxu0 0
    %2677 = vmatpush1.bf16.msra.mxu0 0
    %2678 = vmatprep.subr.bf16.mxu0 0
    %2679 = vmatpush1.bf16.msra.mxu0 0
    %2680 = vmatprep.subr.bf16.mxu0 0
    %2681 = vmatpush1.bf16.msra.mxu0 0
    %2682 = vmatprep.subr.bf16.mxu0 0
    %2683 = vmatpush1.bf16.msra.mxu0 0
    %2684 = vmatprep.subr.bf16.mxu0 0
    %2685 = vmatpush1.bf16.msra.mxu0 0
    %2686 = vmatprep.subr.bf16.mxu0 0
    %2687 = vmatpush1.bf16.msra.mxu0 0
    %2688 = vmatprep.subr.bf16.mxu0 0
    %2689 = vmatpush1.bf16.msra.mxu0 0
    %2690 = vmatprep.mubr.bf16.mxu0 0
    %2691 = vmatmul.mubr.bf16.gmra.mrb[0].mxu0 %v2656
    %v2692 = vpop.f32.mrb[0].mxu0
    %v2693 = vadd.f32 0.0, %v2692
    %v2694 = vpop.f32.mrb[0].mxu0
    %v2695 = vpop.f32.mrb[0].mxu0
    %v2696 = vadd.f32 0.0, %v2695
    %v2697 = vpop.f32.mrb[0].mxu0
    %2698 = vdwg.mxu0
    %v2700 = vsel %vm2338, %v2519, 0
    %2702 = vmatprep.subr.bf16.mxu0 0
    %2703 = vmatpush1.bf16.msra.mxu0 %v1957
    %2704 = vmatprep.subr.bf16.mxu0 0
    %2705 = vmatpush1.bf16.msra.mxu0 0
    %2706 = vmatprep.subr.bf16.mxu0 0
    %2707 = vmatpush1.bf16.msra.mxu0 0
    %2708 = vmatprep.subr.bf16.mxu0 0
    %2709 = vmatpush1.bf16.msra.mxu0 0
    %2710 = vmatprep.subr.bf16.mxu0 0
    %2711 = vmatpush1.bf16.msra.mxu0 0
    %2712 = vmatprep.subr.bf16.mxu0 0
    %2713 = vmatpush1.bf16.msra.mxu0 0
    %2714 = vmatprep.subr.bf16.mxu0 0
    %2715 = vmatpush1.bf16.msra.mxu0 0
    %2716 = vmatprep.subr.bf16.mxu0 0
    %2717 = vmatpush1.bf16.msra.mxu0 0
    %2718 = vmatprep.subr.bf16.mxu0 0
    %2719 = vmatpush1.bf16.msra.mxu0 0
    %2720 = vmatprep.subr.bf16.mxu0 0
    %2721 = vmatpush1.bf16.msra.mxu0 0
    %2722 = vmatprep.subr.bf16.mxu0 0
    %2723 = vmatpush1.bf16.msra.mxu0 0
    %2724 = vmatprep.subr.bf16.mxu0 0
    %2725 = vmatpush1.bf16.msra.mxu0 0
    %2726 = vmatprep.subr.bf16.mxu0 0
    %2727 = vmatpush1.bf16.msra.mxu0 0
    %2728 = vmatprep.subr.bf16.mxu0 0
    %2729 = vmatpush1.bf16.msra.mxu0 0
    %2730 = vmatprep.subr.bf16.mxu0 0
    %2731 = vmatpush1.bf16.msra.mxu0 0
    %2732 = vmatprep.subr.bf16.mxu0 0
    %2733 = vmatpush1.bf16.msra.mxu0 0
    %2734 = vmatprep.mubr.bf16.mxu0 0
    %2735 = vmatmul.mubr.bf16.gmra.mrb[0].mxu0 %v2700
    %v2736 = vpop.f32.mrb[0].mxu0
    %v2737 = vadd.f32 0.0, %v2736
    %v2738 = vpop.f32.mrb[0].mxu0
    %v2739 = vpop.f32.mrb[0].mxu0
    %v2740 = vadd.f32 0.0, %v2739
    %v2741 = vpop.f32.mrb[0].mxu0
    %2742 = vdwg.mxu0
    %v2744 = vsel %vm2338, %v2520, 0
    %2746 = vmatprep.subr.bf16.mxu0 0
    %2747 = vmatpush1.bf16.msra.mxu0 %v1958
    %2748 = vmatprep.subr.bf16.mxu0 0
    %2749 = vmatpush1.bf16.msra.mxu0 0
    %2750 = vmatprep.subr.bf16.mxu0 0
    %2751 = vmatpush1.bf16.msra.mxu0 0
    %2752 = vmatprep.subr.bf16.mxu0 0
    %2753 = vmatpush1.bf16.msra.mxu0 0
    %2754 = vmatprep.subr.bf16.mxu0 0
    %2755 = vmatpush1.bf16.msra.mxu0 0
    %2756 = vmatprep.subr.bf16.mxu0 0
    %2757 = vmatpush1.bf16.msra.mxu0 0
    %2758 = vmatprep.subr.bf16.mxu0 0
    %2759 = vmatpush1.bf16.msra.mxu0 0
    %2760 = vmatprep.subr.bf16.mxu0 0
    %2761 = vmatpush1.bf16.msra.mxu0 0
    %2762 = vmatprep.subr.bf16.mxu0 0
    %2763 = vmatpush1.bf16.msra.mxu0 0
    %2764 = vmatprep.subr.bf16.mxu0 0
    %2765 = vmatpush1.bf16.msra.mxu0 0
    %2766 = vmatprep.subr.bf16.mxu0 0
    %2767 = vmatpush1.bf16.msra.mxu0 0
    %2768 = vmatprep.subr.bf16.mxu0 0
    %2769 = vmatpush1.bf16.msra.mxu0 0
    %2770 = vmatprep.subr.bf16.mxu0 0
    %2771 = vmatpush1.bf16.msra.mxu0 0
    %2772 = vmatprep.subr.bf16.mxu0 0
    %2773 = vmatpush1.bf16.msra.mxu0 0
    %2774 = vmatprep.subr.bf16.mxu0 0
    %2775 = vmatpush1.bf16.msra.mxu0 0
    %2776 = vmatprep.subr.bf16.mxu0 0
    %2777 = vmatpush1.bf16.msra.mxu0 0
    %2778 = vmatprep.mubr.bf16.mxu0 0
    %2779 = vmatmul.mubr.bf16.gmra.mrb[0].mxu0 %v2744
    %v2780 = vpop.f32.mrb[0].mxu0
    %v2781 = vadd.f32 0.0, %v2780
    %v2782 = vpop.f32.mrb[0].mxu0
    %v2783 = vpop.f32.mrb[0].mxu0
    %v2784 = vadd.f32 0.0, %v2783
    %v2785 = vpop.f32.mrb[0].mxu0
    %2786 = vdwg.mxu0
    %v2788 = vsel %vm2338, %v2521, 0
    %2790 = vmatprep.subr.bf16.mxu0 0
    %2791 = vmatpush1.bf16.msra.mxu0 %v1959
    %2792 = vmatprep.subr.bf16.mxu0 0
    %2793 = vmatpush1.bf16.msra.mxu0 0
    %2794 = vmatprep.subr.bf16.mxu0 0
    %2795 = vmatpush1.bf16.msra.mxu0 0
    %2796 = vmatprep.subr.bf16.mxu0 0
    %2797 = vmatpush1.bf16.msra.mxu0 0
    %2798 = vmatprep.subr.bf16.mxu0 0
    %2799 = vmatpush1.bf16.msra.mxu0 0
    %2800 = vmatprep.subr.bf16.mxu0 0
    %2801 = vmatpush1.bf16.msra.mxu0 0
    %2802 = vmatprep.subr.bf16.mxu0 0
    %2803 = vmatpush1.bf16.msra.mxu0 0
    %2804 = vmatprep.subr.bf16.mxu0 0
    %2805 = vmatpush1.bf16.msra.mxu0 0
    %2806 = vmatprep.subr.bf16.mxu0 0
    %2807 = vmatpush1.bf16.msra.mxu0 0
    %2808 = vmatprep.subr.bf16.mxu0 0
    %2809 = vmatpush1.bf16.msra.mxu0 0
    %2810 = vmatprep.subr.bf16.mxu0 0
    %2811 = vmatpush1.bf16.msra.mxu0 0
    %2812 = vmatprep.subr.bf16.mxu0 0
    %2813 = vmatpush1.bf16.msra.mxu0 0
    %2814 = vmatprep.subr.bf16.mxu0 0
    %2815 = vmatpush1.bf16.msra.mxu0 0
    %2816 = vmatprep.subr.bf16.mxu0 0
    %2817 = vmatpush1.bf16.msra.mxu0 0
    %2818 = vmatprep.subr.bf16.mxu0 0
    %2819 = vmatpush1.bf16.msra.mxu0 0
    %2820 = vmatprep.subr.bf16.mxu0 0
    %2821 = vmatpush1.bf16.msra.mxu0 0
    %2822 = vmatprep.mubr.bf16.mxu0 0
    %2823 = vmatmul.mubr.bf16.gmra.mrb[0].mxu0 %v2788
    %v2824 = vpop.f32.mrb[0].mxu0
    %v2825 = vadd.f32 0.0, %v2824
    %v2826 = vpop.f32.mrb[0].mxu0
    %v2827 = vpop.f32.mrb[0].mxu0
    %v2828 = vadd.f32 0.0, %v2827
    %v2829 = vpop.f32.mrb[0].mxu0
    %2830 = vdwg.mxu0
    %v2832 = vsel %vm2338, %v2522, 0
    %2834 = vmatprep.subr.bf16.mxu0 0
    %2835 = vmatpush1.bf16.msra.mxu0 %v1960
    %2836 = vmatprep.subr.bf16.mxu0 0
    %2837 = vmatpush1.bf16.msra.mxu0 0
    %2838 = vmatprep.subr.bf16.mxu0 0
    %2839 = vmatpush1.bf16.msra.mxu0 0
    %2840 = vmatprep.subr.bf16.mxu0 0
    %2841 = vmatpush1.bf16.msra.mxu0 0
    %2842 = vmatprep.subr.bf16.mxu0 0
    %2843 = vmatpush1.bf16.msra.mxu0 0
    %2844 = vmatprep.subr.bf16.mxu0 0
    %2845 = vmatpush1.bf16.msra.mxu0 0
    %2846 = vmatprep.subr.bf16.mxu0 0
    %2847 = vmatpush1.bf16.msra.mxu0 0
    %2848 = vmatprep.subr.bf16.mxu0 0
    %2849 = vmatpush1.bf16.msra.mxu0 0
    %2850 = vmatprep.subr.bf16.mxu0 0
    %2851 = vmatpush1.bf16.msra.mxu0 0
    %2852 = vmatprep.subr.bf16.mxu0 0
    %2853 = vmatpush1.bf16.msra.mxu0 0
    %2854 = vmatprep.subr.bf16.mxu0 0
    %2855 = vmatpush1.bf16.msra.mxu0 0
    %2856 = vmatprep.subr.bf16.mxu0 0
    %2857 = vmatpush1.bf16.msra.mxu0 0
    %2858 = vmatprep.subr.bf16.mxu0 0
    %2859 = vmatpush1.bf16.msra.mxu0 0
    %2860 = vmatprep.subr.bf16.mxu0 0
    %2861 = vmatpush1.bf16.msra.mxu0 0
    %2862 = vmatprep.subr.bf16.mxu0 0
    %2863 = vmatpush1.bf16.msra.mxu0 0
    %2864 = vmatprep.subr.bf16.mxu0 0
    %2865 = vmatpush1.bf16.msra.mxu0 0
    %2866 = vmatprep.mubr.bf16.mxu0 0
    %2867 = vmatmul.mubr.bf16.gmra.mrb[0].mxu0 %v2832
    %v2868 = vpop.f32.mrb[0].mxu0
    %v2869 = vadd.f32 0.0, %v2868
    %v2870 = vpop.f32.mrb[0].mxu0
    %v2871 = vpop.f32.mrb[0].mxu0
    %v2872 = vadd.f32 0.0, %v2871
    %v2873 = vpop.f32.mrb[0].mxu0
    %2874 = vdwg.mxu0
    %v2875 = vcombine.low %v2561, %v2649
    %v2876 = vcombine.high %v2561, %v2649
    %v2878 = vunpack.c.l.s4 1983009808
    %v2879 = vunpack.c.0.s8 %v2878
    %v2880 = vlaneseq
    %v2881 = vshrl.u32 %v2880, 7
    %v2882 = vsub.s32 %v2879, %v2881
    %v2883 = vrot.slane %v2875, %v2882
    %v2885 = vunpack.c.l.s4 1983009808
    %v2886 = vunpack.c.0.s8 %v2885
    %v2887 = vlaneseq
    %v2888 = vshrl.u32 %v2887, 7
    %v2889 = vsub.s32 %v2886, %v2888
    %v2890 = vrot.slane %v2876, %v2889
    %v2891 = vcombine.low %v2605, %v2693
    %v2892 = vcombine.high %v2605, %v2693
    %v2894 = vunpack.c.l.s4 1983009808
    %v2895 = vunpack.c.0.s8 %v2894
    %v2896 = vlaneseq
    %v2897 = vshrl.u32 %v2896, 7
    %v2898 = vsub.s32 %v2895, %v2897
    %v2899 = vrot.slane %v2891, %v2898
    %v2901 = vunpack.c.l.s4 1983009808
    %v2902 = vunpack.c.0.s8 %v2901
    %v2903 = vlaneseq
    %v2904 = vshrl.u32 %v2903, 7
    %v2905 = vsub.s32 %v2902, %v2904
    %v2906 = vrot.slane %v2892, %v2905
    %v2907 = vcombine.low %v2883, %v2899
    %v2908 = vcombine.high %v2883, %v2899
    %v2910 = vunpack.c.l.s4 1934713408
    %v2911 = vunpack.c.0.s8 %v2910
    %v2912 = vlaneseq
    %v2913 = vshrl.u32 %v2912, 7
    %v2914 = vsub.s32 %v2911, %v2913
    %v2915 = vrot.slane %v2907, %v2914
    %v2917 = vunpack.c.l.s4 1934713408
    %v2918 = vunpack.c.0.s8 %v2917
    %v2919 = vlaneseq
    %v2920 = vshrl.u32 %v2919, 7
    %v2921 = vsub.s32 %v2918, %v2920
    %v2922 = vrot.slane %v2908, %v2921
    %v2923 = vcombine.low %v2890, %v2906
    %v2924 = vcombine.high %v2890, %v2906
    %v2926 = vunpack.c.l.s4 1934713408
    %v2927 = vunpack.c.0.s8 %v2926
    %v2928 = vlaneseq
    %v2929 = vshrl.u32 %v2928, 7
    %v2930 = vsub.s32 %v2927, %v2929
    %v2931 = vrot.slane %v2923, %v2930
    %v2933 = vunpack.c.l.s4 1934713408
    %v2934 = vunpack.c.0.s8 %v2933
    %v2935 = vlaneseq
    %v2936 = vshrl.u32 %v2935, 7
    %v2937 = vsub.s32 %v2934, %v2936
    %v2938 = vrot.slane %v2924, %v2937
    %v2939 = vcombine.high %v2915, 0.0
    %v2940 = vcombine.high %v2922, 0.0
    %v2941 = vcombine.high %v2931, 0.0
    %v2942 = vcombine.high %v2938, 0.0
    %v2943 = vcombine.low %v2564, %v2652
    %v2944 = vcombine.high %v2564, %v2652
    %v2946 = vunpack.c.l.s4 1983009808
    %v2947 = vunpack.c.0.s8 %v2946
    %v2948 = vlaneseq
    %v2949 = vshrl.u32 %v2948, 7
    %v2950 = vsub.s32 %v2947, %v2949
    %v2951 = vrot.slane %v2943, %v2950
    %v2953 = vunpack.c.l.s4 1983009808
    %v2954 = vunpack.c.0.s8 %v2953
    %v2955 = vlaneseq
    %v2956 = vshrl.u32 %v2955, 7
    %v2957 = vsub.s32 %v2954, %v2956
    %v2958 = vrot.slane %v2944, %v2957
    %v2959 = vcombine.low %v2608, %v2696
    %v2960 = vcombine.high %v2608, %v2696
    %v2962 = vunpack.c.l.s4 1983009808
    %v2963 = vunpack.c.0.s8 %v2962
    %v2964 = vlaneseq
    %v2965 = vshrl.u32 %v2964, 7
    %v2966 = vsub.s32 %v2963, %v2965
    %v2967 = vrot.slane %v2959, %v2966
    %v2969 = vunpack.c.l.s4 1983009808
    %v2970 = vunpack.c.0.s8 %v2969
    %v2971 = vlaneseq
    %v2972 = vshrl.u32 %v2971, 7
    %v2973 = vsub.s32 %v2970, %v2972
    %v2974 = vrot.slane %v2960, %v2973
    %v2975 = vcombine.low %v2951, %v2967
    %v2976 = vcombine.high %v2951, %v2967
    %v2978 = vunpack.c.l.s4 1934713408
    %v2979 = vunpack.c.0.s8 %v2978
    %v2980 = vlaneseq
    %v2981 = vshrl.u32 %v2980, 7
    %v2982 = vsub.s32 %v2979, %v2981
    %v2983 = vrot.slane %v2975, %v2982
    %v2985 = vunpack.c.l.s4 1934713408
    %v2986 = vunpack.c.0.s8 %v2985
    %v2987 = vlaneseq
    %v2988 = vshrl.u32 %v2987, 7
    %v2989 = vsub.s32 %v2986, %v2988
    %v2990 = vrot.slane %v2976, %v2989
    %v2991 = vcombine.low %v2958, %v2974
    %v2992 = vcombine.high %v2958, %v2974
    %v2994 = vunpack.c.l.s4 1934713408
    %v2995 = vunpack.c.0.s8 %v2994
    %v2996 = vlaneseq
    %v2997 = vshrl.u32 %v2996, 7
    %v2998 = vsub.s32 %v2995, %v2997
    %v2999 = vrot.slane %v2991, %v2998
    %v3001 = vunpack.c.l.s4 1934713408
    %v3002 = vunpack.c.0.s8 %v3001
    %v3003 = vlaneseq
    %v3004 = vshrl.u32 %v3003, 7
    %v3005 = vsub.s32 %v3002, %v3004
    %v3006 = vrot.slane %v2992, %v3005
    %v3007 = vcombine.high %v2983, 0.0
    %v3008 = vcombine.high %v2990, 0.0
    %v3009 = vcombine.high %v2999, 0.0
    %v3010 = vcombine.high %v3006, 0.0
    %v3011 = vcombine.low %v2737, %v2825
    %v3012 = vcombine.high %v2737, %v2825
    %v3014 = vunpack.c.l.s4 1983009808
    %v3015 = vunpack.c.0.s8 %v3014
    %v3016 = vlaneseq
    %v3017 = vshrl.u32 %v3016, 7
    %v3018 = vsub.s32 %v3015, %v3017
    %v3019 = vrot.slane %v3011, %v3018
    %v3021 = vunpack.c.l.s4 1983009808
    %v3022 = vunpack.c.0.s8 %v3021
    %v3023 = vlaneseq
    %v3024 = vshrl.u32 %v3023, 7
    %v3025 = vsub.s32 %v3022, %v3024
    %v3026 = vrot.slane %v3012, %v3025
    %v3027 = vcombine.low %v2781, %v2869
    %v3028 = vcombine.high %v2781, %v2869
    %v3030 = vunpack.c.l.s4 1983009808
    %v3031 = vunpack.c.0.s8 %v3030
    %v3032 = vlaneseq
    %v3033 = vshrl.u32 %v3032, 7
    %v3034 = vsub.s32 %v3031, %v3033
    %v3035 = vrot.slane %v3027, %v3034
    %v3037 = vunpack.c.l.s4 1983009808
    %v3038 = vunpack.c.0.s8 %v3037
    %v3039 = vlaneseq
    %v3040 = vshrl.u32 %v3039, 7
    %v3041 = vsub.s32 %v3038, %v3040
    %v3042 = vrot.slane %v3028, %v3041
    %v3043 = vcombine.low %v3019, %v3035
    %v3044 = vcombine.high %v3019, %v3035
    %v3046 = vunpack.c.l.s4 1934713408
    %v3047 = vunpack.c.0.s8 %v3046
    %v3048 = vlaneseq
    %v3049 = vshrl.u32 %v3048, 7
    %v3050 = vsub.s32 %v3047, %v3049
    %v3051 = vrot.slane %v3043, %v3050
    %v3053 = vunpack.c.l.s4 1934713408
    %v3054 = vunpack.c.0.s8 %v3053
    %v3055 = vlaneseq
    %v3056 = vshrl.u32 %v3055, 7
    %v3057 = vsub.s32 %v3054, %v3056
    %v3058 = vrot.slane %v3044, %v3057
    %v3059 = vcombine.low %v3026, %v3042
    %v3060 = vcombine.high %v3026, %v3042
    %v3062 = vunpack.c.l.s4 1934713408
    %v3063 = vunpack.c.0.s8 %v3062
    %v3064 = vlaneseq
    %v3065 = vshrl.u32 %v3064, 7
    %v3066 = vsub.s32 %v3063, %v3065
    %v3067 = vrot.slane %v3059, %v3066
    %v3069 = vunpack.c.l.s4 1934713408
    %v3070 = vunpack.c.0.s8 %v3069
    %v3071 = vlaneseq
    %v3072 = vshrl.u32 %v3071, 7
    %v3073 = vsub.s32 %v3070, %v3072
    %v3074 = vrot.slane %v3060, %v3073
    %v3075 = vcombine.high %v3051, 0.0
    %v3076 = vcombine.high %v3058, 0.0
    %v3077 = vcombine.high %v3067, 0.0
    %v3078 = vcombine.high %v3074, 0.0
    %v3079 = vcombine.low %v2740, %v2828
    %v3080 = vcombine.high %v2740, %v2828
    %v3082 = vunpack.c.l.s4 1983009808
    %v3083 = vunpack.c.0.s8 %v3082
    %v3084 = vlaneseq
    %v3085 = vshrl.u32 %v3084, 7
    %v3086 = vsub.s32 %v3083, %v3085
    %v3087 = vrot.slane %v3079, %v3086
    %v3089 = vunpack.c.l.s4 1983009808
    %v3090 = vunpack.c.0.s8 %v3089
    %v3091 = vlaneseq
    %v3092 = vshrl.u32 %v3091, 7
    %v3093 = vsub.s32 %v3090, %v3092
    %v3094 = vrot.slane %v3080, %v3093
    %v3095 = vcombine.low %v2784, %v2872
    %v3096 = vcombine.high %v2784, %v2872
    %v3098 = vunpack.c.l.s4 1983009808
    %v3099 = vunpack.c.0.s8 %v3098
    %v3100 = vlaneseq
    %v3101 = vshrl.u32 %v3100, 7
    %v3102 = vsub.s32 %v3099, %v3101
    %v3103 = vrot.slane %v3095, %v3102
    %v3105 = vunpack.c.l.s4 1983009808
    %v3106 = vunpack.c.0.s8 %v3105
    %v3107 = vlaneseq
    %v3108 = vshrl.u32 %v3107, 7
    %v3109 = vsub.s32 %v3106, %v3108
    %v3110 = vrot.slane %v3096, %v3109
    %v3111 = vcombine.low %v3087, %v3103
    %v3112 = vcombine.high %v3087, %v3103
    %v3114 = vunpack.c.l.s4 1934713408
    %v3115 = vunpack.c.0.s8 %v3114
    %v3116 = vlaneseq
    %v3117 = vshrl.u32 %v3116, 7
    %v3118 = vsub.s32 %v3115, %v3117
    %v3119 = vrot.slane %v3111, %v3118
    %v3121 = vunpack.c.l.s4 1934713408
    %v3122 = vunpack.c.0.s8 %v3121
    %v3123 = vlaneseq
    %v3124 = vshrl.u32 %v3123, 7
    %v3125 = vsub.s32 %v3122, %v3124
    %v3126 = vrot.slane %v3112, %v3125
    %v3127 = vcombine.low %v3094, %v3110
    %v3128 = vcombine.high %v3094, %v3110
    %v3130 = vunpack.c.l.s4 1934713408
    %v3131 = vunpack.c.0.s8 %v3130
    %v3132 = vlaneseq
    %v3133 = vshrl.u32 %v3132, 7
    %v3134 = vsub.s32 %v3131, %v3133
    %v3135 = vrot.slane %v3127, %v3134
    %v3137 = vunpack.c.l.s4 1934713408
    %v3138 = vunpack.c.0.s8 %v3137
    %v3139 = vlaneseq
    %v3140 = vshrl.u32 %v3139, 7
    %v3141 = vsub.s32 %v3138, %v3140
    %v3142 = vrot.slane %v3128, %v3141
    %v3143 = vcombine.high %v3119, 0.0
    %v3144 = vcombine.high %v3126, 0.0
    %v3145 = vcombine.high %v3135, 0.0
    %v3146 = vcombine.high %v3142, 0.0
    %v3147 = vcombine.low %v2915, %v2922
    %v3149 = vunpack.c.l.s4 1983009808
    %v3150 = vunpack.c.0.s8 %v3149
    %v3151 = vlaneseq
    %v3152 = vshrl.u32 %v3151, 7
    %v3153 = vsub.s32 %v3150, %v3152
    %v3154 = vrot.slane %v3147, %v3153
    %v3155 = vcombine.low %v2939, %v2940
    %v3157 = vunpack.c.l.s4 1983009808
    %v3158 = vunpack.c.0.s8 %v3157
    %v3159 = vlaneseq
    %v3160 = vshrl.u32 %v3159, 7
    %v3161 = vsub.s32 %v3158, %v3160
    %v3162 = vrot.slane %v3155, %v3161
    %v3163 = vcombine.low %v2931, %v2938
    %v3165 = vunpack.c.l.s4 1983009808
    %v3166 = vunpack.c.0.s8 %v3165
    %v3167 = vlaneseq
    %v3168 = vshrl.u32 %v3167, 7
    %v3169 = vsub.s32 %v3166, %v3168
    %v3170 = vrot.slane %v3163, %v3169
    %v3171 = vcombine.low %v2941, %v2942
    %v3173 = vunpack.c.l.s4 1983009808
    %v3174 = vunpack.c.0.s8 %v3173
    %v3175 = vlaneseq
    %v3176 = vshrl.u32 %v3175, 7
    %v3177 = vsub.s32 %v3174, %v3176
    %v3178 = vrot.slane %v3171, %v3177
    %v3179 = vcombine.low %v3154, %v3162
    %v3180 = vcombine.high %v3154, %v3162
    %v3182 = vunpack.c.l.s4 1934713408
    %v3183 = vunpack.c.0.s8 %v3182
    %v3184 = vlaneseq
    %v3185 = vshrl.u32 %v3184, 7
    %v3186 = vsub.s32 %v3183, %v3185
    %v3187 = vrot.slane %v3179, %v3186
    %v3189 = vunpack.c.l.s4 1934713408
    %v3190 = vunpack.c.0.s8 %v3189
    %v3191 = vlaneseq
    %v3192 = vshrl.u32 %v3191, 7
    %v3193 = vsub.s32 %v3190, %v3192
    %v3194 = vrot.slane %v3180, %v3193
    %v3195 = vcombine.low %v3170, %v3178
    %v3196 = vcombine.high %v3170, %v3178
    %v3198 = vunpack.c.l.s4 1934713408
    %v3199 = vunpack.c.0.s8 %v3198
    %v3200 = vlaneseq
    %v3201 = vshrl.u32 %v3200, 7
    %v3202 = vsub.s32 %v3199, %v3201
    %v3203 = vrot.slane %v3195, %v3202
    %v3205 = vunpack.c.l.s4 1934713408
    %v3206 = vunpack.c.0.s8 %v3205
    %v3207 = vlaneseq
    %v3208 = vshrl.u32 %v3207, 7
    %v3209 = vsub.s32 %v3206, %v3208
    %v3210 = vrot.slane %v3196, %v3209
    %v3211 = vcombine.low %v3187, %v3203
    %v3212 = vcombine.high %v3187, %v3203
    %v3213 = vcombine.low %v3194, %v3210
    %v3214 = vcombine.high %v3194, %v3210
    %v3215 = vcombine.low %v2983, %v2990
    %v3217 = vunpack.c.l.s4 1983009808
    %v3218 = vunpack.c.0.s8 %v3217
    %v3219 = vlaneseq
    %v3220 = vshrl.u32 %v3219, 7
    %v3221 = vsub.s32 %v3218, %v3220
    %v3222 = vrot.slane %v3215, %v3221
    %v3223 = vcombine.low %v3007, %v3008
    %v3225 = vunpack.c.l.s4 1983009808
    %v3226 = vunpack.c.0.s8 %v3225
    %v3227 = vlaneseq
    %v3228 = vshrl.u32 %v3227, 7
    %v3229 = vsub.s32 %v3226, %v3228
    %v3230 = vrot.slane %v3223, %v3229
    %v3231 = vcombine.low %v2999, %v3006
    %v3233 = vunpack.c.l.s4 1983009808
    %v3234 = vunpack.c.0.s8 %v3233
    %v3235 = vlaneseq
    %v3236 = vshrl.u32 %v3235, 7
    %v3237 = vsub.s32 %v3234, %v3236
    %v3238 = vrot.slane %v3231, %v3237
    %v3239 = vcombine.low %v3009, %v3010
    %v3241 = vunpack.c.l.s4 1983009808
    %v3242 = vunpack.c.0.s8 %v3241
    %v3243 = vlaneseq
    %v3244 = vshrl.u32 %v3243, 7
    %v3245 = vsub.s32 %v3242, %v3244
    %v3246 = vrot.slane %v3239, %v3245
    %v3247 = vcombine.low %v3222, %v3230
    %v3248 = vcombine.high %v3222, %v3230
    %v3250 = vunpack.c.l.s4 1934713408
    %v3251 = vunpack.c.0.s8 %v3250
    %v3252 = vlaneseq
    %v3253 = vshrl.u32 %v3252, 7
    %v3254 = vsub.s32 %v3251, %v3253
    %v3255 = vrot.slane %v3247, %v3254
    %v3257 = vunpack.c.l.s4 1934713408
    %v3258 = vunpack.c.0.s8 %v3257
    %v3259 = vlaneseq
    %v3260 = vshrl.u32 %v3259, 7
    %v3261 = vsub.s32 %v3258, %v3260
    %v3262 = vrot.slane %v3248, %v3261
    %v3263 = vcombine.low %v3238, %v3246
    %v3264 = vcombine.high %v3238, %v3246
    %v3266 = vunpack.c.l.s4 1934713408
    %v3267 = vunpack.c.0.s8 %v3266
    %v3268 = vlaneseq
    %v3269 = vshrl.u32 %v3268, 7
    %v3270 = vsub.s32 %v3267, %v3269
    %v3271 = vrot.slane %v3263, %v3270
    %v3273 = vunpack.c.l.s4 1934713408
    %v3274 = vunpack.c.0.s8 %v3273
    %v3275 = vlaneseq
    %v3276 = vshrl.u32 %v3275, 7
    %v3277 = vsub.s32 %v3274, %v3276
    %v3278 = vrot.slane %v3264, %v3277
    %v3279 = vcombine.low %v3255, %v3271
    %v3280 = vcombine.high %v3255, %v3271
    %v3281 = vcombine.low %v3262, %v3278
    %v3282 = vcombine.high %v3262, %v3278
    %v3283 = vcombine.low %v3051, %v3058
    %v3285 = vunpack.c.l.s4 1983009808
    %v3286 = vunpack.c.0.s8 %v3285
    %v3287 = vlaneseq
    %v3288 = vshrl.u32 %v3287, 7
    %v3289 = vsub.s32 %v3286, %v3288
    %v3290 = vrot.slane %v3283, %v3289
    %v3291 = vcombine.low %v3075, %v3076
    %v3293 = vunpack.c.l.s4 1983009808
    %v3294 = vunpack.c.0.s8 %v3293
    %v3295 = vlaneseq
    %v3296 = vshrl.u32 %v3295, 7
    %v3297 = vsub.s32 %v3294, %v3296
    %v3298 = vrot.slane %v3291, %v3297
    %v3299 = vcombine.low %v3067, %v3074
    %v3301 = vunpack.c.l.s4 1983009808
    %v3302 = vunpack.c.0.s8 %v3301
    %v3303 = vlaneseq
    %v3304 = vshrl.u32 %v3303, 7
    %v3305 = vsub.s32 %v3302, %v3304
    %v3306 = vrot.slane %v3299, %v3305
    %v3307 = vcombine.low %v3077, %v3078
    %v3309 = vunpack.c.l.s4 1983009808
    %v3310 = vunpack.c.0.s8 %v3309
    %v3311 = vlaneseq
    %v3312 = vshrl.u32 %v3311, 7
    %v3313 = vsub.s32 %v3310, %v3312
    %v3314 = vrot.slane %v3307, %v3313
    %v3315 = vcombine.low %v3290, %v3298
    %v3316 = vcombine.high %v3290, %v3298
    %v3318 = vunpack.c.l.s4 1934713408
    %v3319 = vunpack.c.0.s8 %v3318
    %v3320 = vlaneseq
    %v3321 = vshrl.u32 %v3320, 7
    %v3322 = vsub.s32 %v3319, %v3321
    %v3323 = vrot.slane %v3315, %v3322
    %v3325 = vunpack.c.l.s4 1934713408
    %v3326 = vunpack.c.0.s8 %v3325
    %v3327 = vlaneseq
    %v3328 = vshrl.u32 %v3327, 7
    %v3329 = vsub.s32 %v3326, %v3328
    %v3330 = vrot.slane %v3316, %v3329
    %v3331 = vcombine.low %v3306, %v3314
    %v3332 = vcombine.high %v3306, %v3314
    %v3334 = vunpack.c.l.s4 1934713408
    %v3335 = vunpack.c.0.s8 %v3334
    %v3336 = vlaneseq
    %v3337 = vshrl.u32 %v3336, 7
    %v3338 = vsub.s32 %v3335, %v3337
    %v3339 = vrot.slane %v3331, %v3338
    %v3341 = vunpack.c.l.s4 1934713408
    %v3342 = vunpack.c.0.s8 %v3341
    %v3343 = vlaneseq
    %v3344 = vshrl.u32 %v3343, 7
    %v3345 = vsub.s32 %v3342, %v3344
    %v3346 = vrot.slane %v3332, %v3345
    %v3347 = vcombine.low %v3323, %v3339
    %v3348 = vcombine.high %v3323, %v3339
    %v3349 = vcombine.low %v3330, %v3346
    %v3350 = vcombine.high %v3330, %v3346
    %v3351 = vcombine.low %v3119, %v3126
    %v3353 = vunpack.c.l.s4 1983009808
    %v3354 = vunpack.c.0.s8 %v3353
    %v3355 = vlaneseq
    %v3356 = vshrl.u32 %v3355, 7
    %v3357 = vsub.s32 %v3354, %v3356
    %v3358 = vrot.slane %v3351, %v3357
    %v3359 = vcombine.low %v3143, %v3144
    %v3361 = vunpack.c.l.s4 1983009808
    %v3362 = vunpack.c.0.s8 %v3361
    %v3363 = vlaneseq
    %v3364 = vshrl.u32 %v3363, 7
    %v3365 = vsub.s32 %v3362, %v3364
    %v3366 = vrot.slane %v3359, %v3365
    %v3367 = vcombine.low %v3135, %v3142
    %v3369 = vunpack.c.l.s4 1983009808
    %v3370 = vunpack.c.0.s8 %v3369
    %v3371 = vlaneseq
    %v3372 = vshrl.u32 %v3371, 7
    %v3373 = vsub.s32 %v3370, %v3372
    %v3374 = vrot.slane %v3367, %v3373
    %v3375 = vcombine.low %v3145, %v3146
    %v3377 = vunpack.c.l.s4 1983009808
    %v3378 = vunpack.c.0.s8 %v3377
    %v3379 = vlaneseq
    %v3380 = vshrl.u32 %v3379, 7
    %v3381 = vsub.s32 %v3378, %v3380
    %v3382 = vrot.slane %v3375, %v3381
    %v3383 = vcombine.low %v3358, %v3366
    %v3384 = vcombine.high %v3358, %v3366
    %v3386 = vunpack.c.l.s4 1934713408
    %v3387 = vunpack.c.0.s8 %v3386
    %v3388 = vlaneseq
    %v3389 = vshrl.u32 %v3388, 7
    %v3390 = vsub.s32 %v3387, %v3389
    %v3391 = vrot.slane %v3383, %v3390
    %v3393 = vunpack.c.l.s4 1934713408
    %v3394 = vunpack.c.0.s8 %v3393
    %v3395 = vlaneseq
    %v3396 = vshrl.u32 %v3395, 7
    %v3397 = vsub.s32 %v3394, %v3396
    %v3398 = vrot.slane %v3384, %v3397
    %v3399 = vcombine.low %v3374, %v3382
    %v3400 = vcombine.high %v3374, %v3382
    %v3402 = vunpack.c.l.s4 1934713408
    %v3403 = vunpack.c.0.s8 %v3402
    %v3404 = vlaneseq
    %v3405 = vshrl.u32 %v3404, 7
    %v3406 = vsub.s32 %v3403, %v3405
    %v3407 = vrot.slane %v3399, %v3406
    %v3409 = vunpack.c.l.s4 1934713408
    %v3410 = vunpack.c.0.s8 %v3409
    %v3411 = vlaneseq
    %v3412 = vshrl.u32 %v3411, 7
    %v3413 = vsub.s32 %v3410, %v3412
    %v3414 = vrot.slane %v3400, %v3413
    %v3415 = vcombine.low %v3391, %v3407
    %v3416 = vcombine.high %v3391, %v3407
    %v3417 = vcombine.low %v3398, %v3414
    %v3418 = vcombine.high %v3398, %v3414
    %3423 = vrot.lane.b32.xlu0 %v3212, 8
    %v3424 = vpop.permute.xlu0 %3423
    %3425 = vrot.lane.b32.xlu0 %v3280, 8
    %v3426 = vpop.permute.xlu0 %3425
    %3427 = vrot.lane.b32.xlu0 %v3348, 8
    %v3428 = vpop.permute.xlu0 %3427
    %3429 = vrot.lane.b32.xlu0 %v3416, 8
    %v3430 = vpop.permute.xlu0 %3429
    %3439 = vrot.lane.b32.xlu0 %v3213, 16
    %v3440 = vpop.permute.xlu0 %3439
    %3441 = vrot.lane.b32.xlu0 %v3281, 16
    %v3442 = vpop.permute.xlu0 %3441
    %3443 = vrot.lane.b32.xlu0 %v3349, 16
    %v3444 = vpop.permute.xlu0 %3443
    %3445 = vrot.lane.b32.xlu0 %v3417, 16
    %v3446 = vpop.permute.xlu0 %3445
    %3455 = vrot.lane.b32.xlu0 %v3214, 24
    %v3456 = vpop.permute.xlu0 %3455
    %3457 = vrot.lane.b32.xlu0 %v3282, 24
    %v3458 = vpop.permute.xlu0 %3457
    %3459 = vrot.lane.b32.xlu0 %v3350, 24
    %v3460 = vpop.permute.xlu0 %3459
    %3461 = vrot.lane.b32.xlu0 %v3418, 24
    %v3462 = vpop.permute.xlu0 %3461
    %v3467 = vsel %vm1961, %v3211, %v3424
    %v3468 = vsel %vm1961, %v3279, %v3426
    %v3469 = vsel %vm1961, %v3347, %v3428
    %v3470 = vsel %vm1961, %v3415, %v3430
    %v3471 = vsel %vm2338, %v3467, %v3440
    %v3472 = vsel %vm2338, %v3468, %v3442
    %v3473 = vsel %vm2338, %v3469, %v3444
    %v3474 = vsel %vm2338, %v3470, %v3446
    %vm3475 = vcmask 195584
    %v3476 = vsel %vm3475, %v3471, %v3456
    %v3477 = vsel %vm3475, %v3472, %v3458
    %v3478 = vsel %vm3475, %v3473, %v3460
    %v3479 = vsel %vm3475, %v3474, %v3462
    %v3480 = vpack.c.bf16 %v3477, %v3476
    %v3481 = vpack.c.bf16 %v3479, %v3478
    %v3482 = vld [vmem:[%s3] sm:$0xf]
    %v3483 = vld [vmem:[%s3 + $0x4] sm:$0xf]
    %v3484 = vld [vmem:[%s3 + $0x8] sm:$0xf]
    %v3485 = vld [vmem:[%s3 + $0xc] sm:$0xf]
    %v3486 = vlaneseq
    %v3487 = vshrl.u32 %v3486, 7
    %v3488 = vsub.s32 0, %v3487
    %v3489 = vrot.slane %v21, %v3488
    %v3494 = vunpack.c.l.b16 %v3482
    %v3495 = vunpack.c.l.b16 %v3483
    %v3496 = vunpack.c.l.b16 %v3484
    %v3497 = vunpack.c.l.b16 %v3485
    %v3498 = vpack.c.b16 %v3495, %v3494
    %v3499 = vpack.c.b16 %v3497, %v3496
    %v3503 = vsel %vm26, %v3480, 0
    %v3506 = vsel %vm26, %v3481, 0
    %3508 = vmatprep.subr.bf16.mxu0 0
    %3509 = vmatpush1.bf16.msra.mxu0 %v3498
    %3510 = vmatprep.subr.bf16.mxu0 0
    %3511 = vmatpush1.bf16.msra.mxu0 %v3499
    %3512 = vmatprep.subr.bf16.mxu0 0
    %3513 = vmatpush1.bf16.msra.mxu0 0
    %3514 = vmatprep.subr.bf16.mxu0 0
    %3515 = vmatpush1.bf16.msra.mxu0 0
    %3516 = vmatprep.subr.bf16.mxu0 0
    %3517 = vmatpush1.bf16.msra.mxu0 0
    %3518 = vmatprep.subr.bf16.mxu0 0
    %3519 = vmatpush1.bf16.msra.mxu0 0
    %3520 = vmatprep.subr.bf16.mxu0 0
    %3521 = vmatpush1.bf16.msra.mxu0 0
    %3522 = vmatprep.subr.bf16.mxu0 0
    %3523 = vmatpush1.bf16.msra.mxu0 0
    %3524 = vmatprep.subr.bf16.mxu0 0
    %3525 = vmatpush1.bf16.msra.mxu0 0
    %3526 = vmatprep.subr.bf16.mxu0 0
    %3527 = vmatpush1.bf16.msra.mxu0 0
    %3528 = vmatprep.subr.bf16.mxu0 0
    %3529 = vmatpush1.bf16.msra.mxu0 0
    %3530 = vmatprep.subr.bf16.mxu0 0
    %3531 = vmatpush1.bf16.msra.mxu0 0
    %3532 = vmatprep.subr.bf16.mxu0 0
    %3533 = vmatpush1.bf16.msra.mxu0 0
    %3534 = vmatprep.subr.bf16.mxu0 0
    %3535 = vmatpush1.bf16.msra.mxu0 0
    %3536 = vmatprep.subr.bf16.mxu0 0
    %3537 = vmatpush1.bf16.msra.mxu0 0
    %3538 = vmatprep.subr.bf16.mxu0 0
    %3539 = vmatpush1.bf16.msra.mxu0 0
    %3540 = vmatprep.mubr.bf16.mxu0 0
    %3541 = vmatmul.mubr.bf16.gmra.mrb[0].mxu0 %v3503
    %v3542 = vpop.f32.mrb[0].mxu0
    %v3543 = vadd.f32 %v3489, %v3542
    %v3544 = vpop.f32.mrb[0].mxu0
    %v3545 = vpop.f32.mrb[0].mxu0
    %v3546 = vadd.f32 %v3489, %v3545
    %v3547 = vpop.f32.mrb[0].mxu0
    %3548 = vmatprep.mubr.bf16.mxu0 0
    %3549 = vmatmul.mubr.bf16.gmra.mrb[0].mxu0 %v3506
    %v3550 = vpop.f32.mrb[0].mxu0
    %v3551 = vadd.f32 %v3489, %v3550
    %v3552 = vpop.f32.mrb[0].mxu0
    %v3553 = vpop.f32.mrb[0].mxu0
    %v3554 = vadd.f32 %v3489, %v3553
    %v3555 = vpop.f32.mrb[0].mxu0
    %3556 = vdwg.mxu0
    %3557 = vst.msk [vmem:[#allocation2] sm:$0xff] %vm26, %v3543
    %3558 = vst.msk [vmem:[#allocation2 + $0x8] sm:$0xff] %vm26, %v3546
    %3559 = vst.msk [vmem:[#allocation2 + $0x10] sm:$0xff] %vm26, %v3551
    %3560 = vst.msk [vmem:[#allocation2 + $0x18] sm:$0xff] %vm26, %v3554
    // Predicated region
    $region18: #{attention_forward.1} parent=1 // pred_check
      _
    $region19: #{attention_forward.1} parent=1 // pred_check_branch
      %3562 = sbr.rel (0) target = $region21
    $region20: #{attention_forward.1} parent=1 // pred_region
      %s3564 = ssub.s32 512, 512
      %3565 = vsyncadd [#allocation3], %s3564
      %s3566 = sshll.u32 [#allocation2], 4
      %s3567 = int_to_ptr.vmem [resolvable:$true] %s3566
      %3572 = dma.vmem_to_hbm [thread:$0]  %s3567, 512, %s4, [#allocation3], 128, 128, 8
    $region21: #{attention_forward.1} parent=1 // pred_fallthru
      _
    // Predicated region
    $region22: #{attention_forward.1} parent=1 // pred_check
      _
    $region23: #{attention_forward.1} parent=1 // pred_check_branch
      %3574 = sbr.rel (0) target = $region25
    $region24: #{attention_forward.1} parent=1 // pred_region
      %3575 = dma.done [#allocation3], 512
    $region25: #{attention_forward.1} parent=1 // pred_fallthru
      _
    %3576 = vsyncpa [#allocation3], 1

</llo_original>
